<compile_context>
chip_gen: v5e
topology: v5e:2x2
jax: 0.10.0
libtpu: 0.0.40
codegen_flags: <defaults>
</compile_context>

<pallas_src>
import math
import functools

import jax
import jax.numpy as jnp
from jax.experimental import pallas as pl
from jax.experimental.pallas import tpu as pltpu


def _layernorm(h, g, b, eps=1e-5):
    mu = jnp.mean(h, axis=-1, keepdims=True)
    var = jnp.mean((h - mu) ** 2, axis=-1, keepdims=True)
    return (h - mu) * jax.lax.rsqrt(var + eps) * g + b


def block_kernel(x_ref, mask_ref,
                 ln1g_ref, ln1b_ref,
                 wq_ref, wkv_ref, wp_ref, bp_ref,
                 ln2g_ref, ln2b_ref,
                 w1_ref, b1_ref, w2_ref, b2_ref,
                 o_ref,
                 k_sc, v_sc,
                 *, n_head):
    T = x_ref.shape[1]
    C = x_ref.shape[2]
    tq = o_ref.shape[1]
    hs = C // n_head
    neg_inf = jnp.float32(-jnp.inf)
    bf16 = jnp.bfloat16

    # global row offset of this query tile
    q0 = pl.multiple_of(pl.program_id(1) * tq, tq)

    # ---- K/V for the whole sequence: computed once per batch element
    #      (first query tile), cached in bf16 VMEM scratch, reused after. ----
    @pl.when(pl.program_id(1) == 0)
    def _():
        h_full = _layernorm(x_ref[0], ln1g_ref[...], ln1b_ref[...])       # (T, C)
        kv = jnp.dot(h_full.astype(bf16), wkv_ref[...],
                     preferred_element_type=jnp.float32)                  # (T, 2C)
        k_sc[...] = kv[:, :C].astype(bf16)
        v_sc[...] = kv[:, C:].astype(bf16)

    # ---- LN1 over this query tile + Q projection (1/sqrt(hs) folded in wq) ----
    x_tile = x_ref[0, pl.ds(q0, tq), :]                                   # (tq, C) f32
    h_tile = _layernorm(x_tile, ln1g_ref[...], ln1b_ref[...])
    mask_tile = mask_ref[0]                                               # (tq, 1) f32

    q = jnp.dot(h_tile.astype(bf16), wq_ref[...],
                preferred_element_type=jnp.float32)                       # (tq, C)
    k = k_sc[...]                                                         # (T, C) bf16
    v = v_sc[...]                                                         # (T, C) bf16

    # causal predicate for this query tile, hoisted out of the head loop
    row = jax.lax.broadcasted_iota(jnp.int32, (tq, T), 0) + q0
    col = jax.lax.broadcasted_iota(jnp.int32, (tq, T), 1)
    causal = col <= row

    dn = (((1,), (1,)), ((), ()))     # contract lhs dim 1 with rhs dim 1 (no .T)
    acc = jnp.zeros((tq, C), jnp.float32)
    for hd in range(n_head):
        sl = slice(hd * hs, (hd + 1) * hs)
        s = jax.lax.dot_general(q[:, sl].astype(bf16), k[:, sl], dn,
                                preferred_element_type=jnp.float32)       # (tq, T)
        # torch: s = mask*s; masked_fill(s==0, -inf); masked_fill(~tril, -inf)
        sm = mask_tile * s
        s = jnp.where(causal & (sm != 0.0), sm, neg_inf)
        # softmax; fully-masked rows (denom == 0) become exactly zero, which
        # matches torch's -inf -> NaN -> masked_fill(isnan, 0) path.
        m = jnp.max(s, axis=-1, keepdims=True)
        m = jnp.where(m == neg_inf, 0.0, m)
        e = jnp.exp(s - m)
        denom = jnp.sum(e, axis=-1, keepdims=True)
        inv = jnp.where(denom == 0.0, 0.0, pl.reciprocal(denom, approx=True))
        p = (e * inv).astype(bf16)
        o_h = jnp.dot(p, v[:, sl], preferred_element_type=jnp.float32)    # (tq, hs)
        # output projection folded into the head loop; wp_ref is (n_head, hs, C)
        acc = acc + jnp.dot(o_h.astype(bf16), wp_ref[hd],
                            preferred_element_type=jnp.float32)           # (tq, C)
    x2 = x_tile + acc + bp_ref[...]

    # ---- LN2 + feed-forward (Linear -> ReLU -> Linear), dropout = identity ----
    h2 = _layernorm(x2, ln2g_ref[...], ln2b_ref[...])
    ff = jnp.dot(h2.astype(bf16), w1_ref[...],
                 preferred_element_type=jnp.float32) + b1_ref[...]
    ff = jnp.maximum(ff, 0.0)
    ff = jnp.dot(ff.astype(bf16), w2_ref[...],
                 preferred_element_type=jnp.float32) + b2_ref[...]
    o_ref[0] = x2 + ff


def gpt_block(x, attention_mask, params, n_head, tq=None):
    B, T, C = x.shape
    hs = C // n_head
    if tq is None:
        tq = 128 if T % 128 == 0 else T
    assert T % tq == 0, "tq must divide T"
    n_qt = T // tq

    p = params
    # mask enters as (B, T, 1): per-query-row multiplier (torch unsqueeze(2)).
    mask3 = attention_mask.reshape(B, T, 1).astype(jnp.float32)

    # bf16 weights halve the VMEM-resident footprint and feed the bf16 MXU.
    wq = (p['wq'] * (1.0 / math.sqrt(hs))).astype(jnp.bfloat16)   # scale folded
    wkv = jnp.concatenate([p['wk'], p['wv']], axis=1).astype(jnp.bfloat16)
    wp3 = p['wp'].reshape(n_head, hs, C).astype(jnp.bfloat16)     # leading-axis head index
    w1 = p['w1'].astype(jnp.bfloat16)
    w2 = p['w2'].astype(jnp.bfloat16)

    def rep(a):  # full-array block, replicated across the grid
        nd = a.ndim
        return pl.BlockSpec(a.shape, lambda b, q, _nd=nd: (0,) * _nd)

    kernel = functools.partial(block_kernel, n_head=n_head)
    out = pl.pallas_call(
        kernel,
        out_shape=jax.ShapeDtypeStruct((B, T, C), jnp.float32),
        grid=(B, n_qt),
        in_specs=[
            pl.BlockSpec((1, T, C), lambda b, q: (b, 0, 0)),   # x (full seq: K/V + tiles)
            pl.BlockSpec((1, tq, 1), lambda b, q: (b, q, 0)),  # mask rows of this tile
            rep(p['ln1_g']), rep(p['ln1_b']),
            rep(wq), rep(wkv), rep(wp3), rep(p['bp']),
            rep(p['ln2_g']), rep(p['ln2_b']),
            rep(w1), rep(p['b1']), rep(w2), rep(p['b2']),
        ],
        out_specs=pl.BlockSpec((1, tq, C), lambda b, q: (b, q, 0)),
        scratch_shapes=[pltpu.VMEM((T, C), jnp.bfloat16),      # K cache (per batch elem)
                        pltpu.VMEM((T, C), jnp.bfloat16)],     # V cache (per batch elem)
        compiler_params=pltpu.CompilerParams(
            dimension_semantics=("parallel", "arbitrary"),
            vmem_limit_bytes=32 * 1024 * 1024),
    )(x.astype(jnp.float32), mask3,
      p['ln1_g'], p['ln1_b'],
      wq, wkv, wp3, p['bp'],
      p['ln2_g'], p['ln2_b'],
      w1, p['b1'], w2, p['b2'])
    # Block.forward returns (x, attention_mask)
    return out, attention_mask


# ---------------- pure-JAX f32 reference (mirrors torch semantics) ----------
def ref_block(x, attention_mask, params, n_head):
    B, T, C = x.shape
    hs = C // n_head
    p = params

    def ln(h, g, b):
        mu = h.mean(-1, keepdims=True)
        var = ((h - mu) ** 2).mean(-1, keepdims=True)
        return (h - mu) / jnp.sqrt(var + 1e-5) * g + b

    h = ln(x, p['ln1_g'], p['ln1_b'])
    mask = attention_mask.astype(x.dtype)[:, :, None]
    causal = jnp.tril(jnp.ones((T, T), bool))
    outs = []
    for hd in range(n_head):
        sl = slice(hd * hs, (hd + 1) * hs)
        q = h @ p['wq'][:, sl]
        k = h @ p['wk'][:, sl]
        v = h @ p['wv'][:, sl]
        s = (q @ jnp.swapaxes(k, -1, -2)) / math.sqrt(hs)
        s = mask * s
        s = jnp.where(s == 0.0, -jnp.inf, s)
        s = jnp.where(causal, s, -jnp.inf)
        pm = jax.nn.softmax(s, axis=-1)
        pm = jnp.where(jnp.isnan(pm), 0.0, pm)
        outs.append(pm @ v)
    attn = jnp.concatenate(outs, -1) @ p['wp'] + p['bp']
    x = x + attn
    h2 = ln(x, p['ln2_g'], p['ln2_b'])
    ff = jnp.maximum(h2 @ p['w1'] + p['b1'], 0.0) @ p['w2'] + p['b2']
    return x + ff


if __name__ == "__main__":
    B, T, C, n_head = 2, 8, 32, 4   # max_length >= T (tril uses only T x T)

    key = jax.random.PRNGKey(0)
    ks = jax.random.split(key, 12)
    s = 0.05
    params = {
        'ln1_g': jnp.ones((1, C), jnp.float32),
        'ln1_b': jnp.zeros((1, C), jnp.float32),
        'wq': s * jax.random.normal(ks[0], (C, C), jnp.float32),
        'wk': s * jax.random.normal(ks[1], (C, C), jnp.float32),
        'wv': s * jax.random.normal(ks[2], (C, C), jnp.float32),
        'wp': s * jax.random.normal(ks[3], (C, C), jnp.float32),
        'bp': s * jax.random.normal(ks[4], (1, C), jnp.float32),
        'ln2_g': jnp.ones((1, C), jnp.float32),
        'ln2_b': jnp.zeros((1, C), jnp.float32),
        'w1': s * jax.random.normal(ks[5], (C, 4 * C), jnp.float32),
        'b1': s * jax.random.normal(ks[6], (1, 4 * C), jnp.float32),
        'w2': s * jax.random.normal(ks[7], (4 * C, C), jnp.float32),
        'b2': s * jax.random.normal(ks[8], (1, C), jnp.float32),
    }

    x = jax.random.normal(ks[9], (B, T, C), jnp.float32)
    # attention mask: batch 0 fully attended, batch 1 masks out the last 2
    # query positions (exercises the fully-masked-row -> zero path).
    attention_mask = jnp.ones((B, T), jnp.float32)
    attention_mask = attention_mask.at[1, T - 2:].set(0.0)

    out, mask_out = gpt_block(x, attention_mask, params, n_head)
    out = jax.block_until_ready(out)

    ref = ref_block(x, attention_mask, params, n_head)
    assert out.shape == (B, T, C)
    # bf16 matmul operands + approx reciprocal => compare against f32 reference
    # with a correspondingly relaxed (but still tight) tolerance.
    assert jnp.allclose(out, ref, rtol=2e-2, atol=2e-2), "mismatch vs reference"
    assert jnp.array_equal(mask_out, attention_mask)

    print("KERNEL_OK")
</pallas_src>

<mosaic_0001>
module attributes {stable_mosaic.version = 11 : i64} {
  func.func @block_kernel(%arg0: i32, %arg1: i32, %arg2: memref<1x8x32xf32, #tpu.memory_space<vmem>>, %arg3: memref<1x8x1xf32, #tpu.memory_space<vmem>>, %arg4: memref<1x32xf32, #tpu.memory_space<vmem>>, %arg5: memref<1x32xf32, #tpu.memory_space<vmem>>, %arg6: memref<32x32xbf16, #tpu.memory_space<vmem>>, %arg7: memref<32x64xbf16, #tpu.memory_space<vmem>>, %arg8: memref<4x8x32xbf16, #tpu.memory_space<vmem>>, %arg9: memref<1x32xf32, #tpu.memory_space<vmem>>, %arg10: memref<1x32xf32, #tpu.memory_space<vmem>>, %arg11: memref<1x32xf32, #tpu.memory_space<vmem>>, %arg12: memref<32x128xbf16, #tpu.memory_space<vmem>>, %arg13: memref<1x128xf32, #tpu.memory_space<vmem>>, %arg14: memref<128x32xbf16, #tpu.memory_space<vmem>>, %arg15: memref<1x32xf32, #tpu.memory_space<vmem>>, %arg16: memref<1x8x32xf32, #tpu.memory_space<vmem>>, %arg17: memref<8x32xbf16, #tpu.memory_space<vmem>>, %arg18: memref<8x32xbf16, #tpu.memory_space<vmem>>) attributes {dimension_semantics = [#tpu.dimension_semantics<parallel>, #tpu.dimension_semantics<arbitrary>], iteration_bounds = array<i64: 2, 1>, scalar_prefetch = 0 : i64, scratch_operands = 2 : i64, tpu.core_type = #tpu.core_type<tc>, window_params = [{transform_indices = @transform_0, window_bounds = array<i64: 1, 8, 32>}, {transform_indices = @transform_1, window_bounds = array<i64: 1, 8, 1>}, {pipeline_mode = #tpu.pipeline_mode<synchronous>, transform_indices = @transform_2, window_bounds = array<i64: 1, 32>}, {pipeline_mode = #tpu.pipeline_mode<synchronous>, transform_indices = @transform_3, window_bounds = array<i64: 1, 32>}, {pipeline_mode = #tpu.pipeline_mode<synchronous>, transform_indices = @transform_4, window_bounds = array<i64: 32, 32>}, {pipeline_mode = #tpu.pipeline_mode<synchronous>, transform_indices = @transform_5, window_bounds = array<i64: 32, 64>}, {pipeline_mode = #tpu.pipeline_mode<synchronous>, transform_indices = @transform_6, window_bounds = array<i64: 4, 8, 32>}, {pipeline_mode = #tpu.pipeline_mode<synchronous>, transform_indices = @transform_7, window_bounds = array<i64: 1, 32>}, {pipeline_mode = #tpu.pipeline_mode<synchronous>, transform_indices = @transform_8, window_bounds = array<i64: 1, 32>}, {pipeline_mode = #tpu.pipeline_mode<synchronous>, transform_indices = @transform_9, window_bounds = array<i64: 1, 32>}, {pipeline_mode = #tpu.pipeline_mode<synchronous>, transform_indices = @transform_10, window_bounds = array<i64: 32, 128>}, {pipeline_mode = #tpu.pipeline_mode<synchronous>, transform_indices = @transform_11, window_bounds = array<i64: 1, 128>}, {pipeline_mode = #tpu.pipeline_mode<synchronous>, transform_indices = @transform_12, window_bounds = array<i64: 128, 32>}, {pipeline_mode = #tpu.pipeline_mode<synchronous>, transform_indices = @transform_13, window_bounds = array<i64: 1, 32>}, {transform_indices = @transform_14, window_bounds = array<i64: 1, 8, 32>}]} {
    %c8_i32 = arith.constant 8 : i32
    %0 = arith.muli %arg1, %c8_i32 : i32
    %1 = tpu.assume_multiple %0, 8 : i32
    %c0_i32 = arith.constant 0 : i32
    %2 = arith.cmpi eq, %arg1, %c0_i32 : i32
    %3 = arith.extui %2 : i1 to i32
    %c0_i32_0 = arith.constant 0 : i32
    %4 = arith.cmpi ne, %3, %c0_i32_0 : i32
    scf.if %4 {
      %c0_99 = arith.constant 0 : index
      %c0_100 = arith.constant 0 : index
      %c0_101 = arith.constant 0 : index
      %239 = vector.load %arg2[%c0_99, %c0_100, %c0_101] : memref<1x8x32xf32, #tpu.memory_space<vmem>>, vector<1x8x32xf32>
      %240 = vector.shape_cast %239 : vector<1x8x32xf32> to vector<8x32xf32>
      %c0_102 = arith.constant 0 : index
      %c0_103 = arith.constant 0 : index
      %241 = vector.load %arg4[%c0_102, %c0_103] : memref<1x32xf32, #tpu.memory_space<vmem>>, vector<1x32xf32>
      %c0_104 = arith.constant 0 : index
      %c0_105 = arith.constant 0 : index
      %242 = vector.load %arg5[%c0_104, %c0_105] : memref<1x32xf32, #tpu.memory_space<vmem>>, vector<1x32xf32>
      %cst_106 = arith.constant dense<0.000000e+00> : vector<8xf32>
      %243 = vector.multi_reduction <add>, %240, %cst_106 [1] : vector<8x32xf32> to vector<8xf32>
      %244 = vector.shape_cast %243 : vector<8xf32> to vector<8x1xf32>
      %cst_107 = arith.constant 3.200000e+01 : f32
      %245 = vector.broadcast %cst_107 : f32 to vector<8x1xf32>
      %246 = arith.divf %244, %245 : vector<8x1xf32>
      %247 = vector.broadcast %246 : vector<8x1xf32> to vector<8x32xf32>
      %248 = arith.subf %240, %247 : vector<8x32xf32>
      %249 = arith.mulf %248, %248 : vector<8x32xf32>
      %cst_108 = arith.constant dense<0.000000e+00> : vector<8xf32>
      %250 = vector.multi_reduction <add>, %249, %cst_108 [1] : vector<8x32xf32> to vector<8xf32>
      %251 = vector.shape_cast %250 : vector<8xf32> to vector<8x1xf32>
      %cst_109 = arith.constant 3.200000e+01 : f32
      %252 = vector.broadcast %cst_109 : f32 to vector<8x1xf32>
      %253 = arith.divf %251, %252 : vector<8x1xf32>
      %254 = vector.broadcast %246 : vector<8x1xf32> to vector<8x32xf32>
      %255 = arith.subf %240, %254 : vector<8x32xf32>
      %cst_110 = arith.constant 9.99999974E-6 : f32
      %256 = vector.broadcast %cst_110 : f32 to vector<8x1xf32>
      %257 = arith.addf %253, %256 : vector<8x1xf32>
      %258 = math.rsqrt %257 : vector<8x1xf32>
      %259 = vector.broadcast %258 : vector<8x1xf32> to vector<8x32xf32>
      %260 = arith.mulf %255, %259 : vector<8x32xf32>
      %261 = vector.broadcast %241 : vector<1x32xf32> to vector<8x32xf32>
      %262 = arith.mulf %260, %261 : vector<8x32xf32>
      %263 = vector.broadcast %242 : vector<1x32xf32> to vector<8x32xf32>
      %264 = arith.addf %262, %263 : vector<8x32xf32>
      %265 = arith.truncf %264 : vector<8x32xf32> to vector<8x32xbf16>
      %c0_111 = arith.constant 0 : index
      %c0_112 = arith.constant 0 : index
      %266 = vector.load %arg7[%c0_111, %c0_112] : memref<32x64xbf16, #tpu.memory_space<vmem>>, vector<32x64xbf16>
      %cst_113 = arith.constant dense<0.000000e+00> : vector<8x64xf32>
      %267 = tpu.matmul %265, %266, %cst_113 {dimension_numbers = #tpu.dot_dimension_numbers<[1], [0], [0], [1], [0, 0, 1, 1], [], []>} : vector<8x32xbf16>, vector<32x64xbf16>, vector<8x64xf32> -> vector<8x64xf32>
      %268 = vector.extract_strided_slice %267 {offsets = [0, 0], sizes = [8, 32], strides = [1, 1]} : vector<8x64xf32> to vector<8x32xf32>
      %269 = arith.truncf %268 : vector<8x32xf32> to vector<8x32xbf16>
      %c0_114 = arith.constant 0 : index
      %c0_115 = arith.constant 0 : index
      %270 = vector.load %arg17[%c0_114, %c0_115] : memref<8x32xbf16, #tpu.memory_space<vmem>>, vector<8x32xbf16>
      tpu.vector_store %arg17[%c0_114, %c0_115], %269 {strides = array<i32>} : memref<8x32xbf16, #tpu.memory_space<vmem>>, vector<8x32xbf16>,
      %271 = vector.extract_strided_slice %267 {offsets = [0, 32], sizes = [8, 32], strides = [1, 1]} : vector<8x64xf32> to vector<8x32xf32>
      %272 = arith.truncf %271 : vector<8x32xf32> to vector<8x32xbf16>
      %c0_116 = arith.constant 0 : index
      %c0_117 = arith.constant 0 : index
      %273 = vector.load %arg18[%c0_116, %c0_117] : memref<8x32xbf16, #tpu.memory_space<vmem>>, vector<8x32xbf16>
      tpu.vector_store %arg18[%c0_116, %c0_117], %272 {strides = array<i32>} : memref<8x32xbf16, #tpu.memory_space<vmem>>, vector<8x32xbf16>,
    } else {
    }
    %c0 = arith.constant 0 : index
    %5 = arith.index_cast %1 : i32 to index
    %c0_1 = arith.constant 0 : index
    %6 = vector.load %arg2[%c0, %5, %c0_1] : memref<1x8x32xf32, #tpu.memory_space<vmem>>, vector<1x8x32xf32>
    %7 = vector.shape_cast %6 : vector<1x8x32xf32> to vector<8x32xf32>
    %c0_2 = arith.constant 0 : index
    %c0_3 = arith.constant 0 : index
    %8 = vector.load %arg4[%c0_2, %c0_3] : memref<1x32xf32, #tpu.memory_space<vmem>>, vector<1x32xf32>
    %c0_4 = arith.constant 0 : index
    %c0_5 = arith.constant 0 : index
    %9 = vector.load %arg5[%c0_4, %c0_5] : memref<1x32xf32, #tpu.memory_space<vmem>>, vector<1x32xf32>
    %cst = arith.constant dense<0.000000e+00> : vector<8xf32>
    %10 = vector.multi_reduction <add>, %7, %cst [1] : vector<8x32xf32> to vector<8xf32>
    %11 = vector.shape_cast %10 : vector<8xf32> to vector<8x1xf32>
    %cst_6 = arith.constant 3.200000e+01 : f32
    %12 = vector.broadcast %cst_6 : f32 to vector<8x1xf32>
    %13 = arith.divf %11, %12 : vector<8x1xf32>
    %14 = vector.broadcast %13 : vector<8x1xf32> to vector<8x32xf32>
    %15 = arith.subf %7, %14 : vector<8x32xf32>
    %16 = arith.mulf %15, %15 : vector<8x32xf32>
    %cst_7 = arith.constant dense<0.000000e+00> : vector<8xf32>
    %17 = vector.multi_reduction <add>, %16, %cst_7 [1] : vector<8x32xf32> to vector<8xf32>
    %18 = vector.shape_cast %17 : vector<8xf32> to vector<8x1xf32>
    %cst_8 = arith.constant 3.200000e+01 : f32
    %19 = vector.broadcast %cst_8 : f32 to vector<8x1xf32>
    %20 = arith.divf %18, %19 : vector<8x1xf32>
    %21 = vector.broadcast %13 : vector<8x1xf32> to vector<8x32xf32>
    %22 = arith.subf %7, %21 : vector<8x32xf32>
    %cst_9 = arith.constant 9.99999974E-6 : f32
    %23 = vector.broadcast %cst_9 : f32 to vector<8x1xf32>
    %24 = arith.addf %20, %23 : vector<8x1xf32>
    %25 = math.rsqrt %24 : vector<8x1xf32>
    %26 = vector.broadcast %25 : vector<8x1xf32> to vector<8x32xf32>
    %27 = arith.mulf %22, %26 : vector<8x32xf32>
    %28 = vector.broadcast %8 : vector<1x32xf32> to vector<8x32xf32>
    %29 = arith.mulf %27, %28 : vector<8x32xf32>
    %30 = vector.broadcast %9 : vector<1x32xf32> to vector<8x32xf32>
    %31 = arith.addf %29, %30 : vector<8x32xf32>
    %c0_10 = arith.constant 0 : index
    %c0_11 = arith.constant 0 : index
    %c0_12 = arith.constant 0 : index
    %32 = vector.load %arg3[%c0_10, %c0_11, %c0_12] : memref<1x8x1xf32, #tpu.memory_space<vmem>>, vector<1x8x1xf32>
    %33 = vector.shape_cast %32 : vector<1x8x1xf32> to vector<8x1xf32>
    %34 = arith.truncf %31 : vector<8x32xf32> to vector<8x32xbf16>
    %c0_13 = arith.constant 0 : index
    %c0_14 = arith.constant 0 : index
    %35 = vector.load %arg6[%c0_13, %c0_14] : memref<32x32xbf16, #tpu.memory_space<vmem>>, vector<32x32xbf16>
    %cst_15 = arith.constant dense<0.000000e+00> : vector<8x32xf32>
    %36 = tpu.matmul %34, %35, %cst_15 {dimension_numbers = #tpu.dot_dimension_numbers<[1], [0], [0], [1], [0, 0, 1, 1], [], []>} : vector<8x32xbf16>, vector<32x32xbf16>, vector<8x32xf32> -> vector<8x32xf32>
    %c0_16 = arith.constant 0 : index
    %c0_17 = arith.constant 0 : index
    %37 = vector.load %arg17[%c0_16, %c0_17] : memref<8x32xbf16, #tpu.memory_space<vmem>>, vector<8x32xbf16>
    %c0_18 = arith.constant 0 : index
    %c0_19 = arith.constant 0 : index
    %38 = vector.load %arg18[%c0_18, %c0_19] : memref<8x32xbf16, #tpu.memory_space<vmem>>, vector<8x32xbf16>
    %39 = tpu.iota {dimensions = array<i32: 0>} : vector<8x8xi32>
    %40 = vector.broadcast %1 : i32 to vector<8x8xi32>
    %41 = arith.addi %39, %40 : vector<8x8xi32>
    %42 = tpu.iota {dimensions = array<i32: 1>} : vector<8x8xi32>
    %43 = arith.cmpi sle, %42, %41 : vector<8x8xi32>
    %cst_20 = arith.constant 0.000000e+00 : f32
    %44 = vector.broadcast %cst_20 : f32 to vector<8x32xf32>
    %45 = vector.extract_strided_slice %36 {offsets = [0, 0], sizes = [8, 8], strides = [1, 1]} : vector<8x32xf32> to vector<8x8xf32>
    %46 = arith.truncf %45 : vector<8x8xf32> to vector<8x8xbf16>
    %47 = vector.extract_strided_slice %37 {offsets = [0, 0], sizes = [8, 8], strides = [1, 1]} : vector<8x32xbf16> to vector<8x8xbf16>
    %cst_21 = arith.constant dense<0.000000e+00> : vector<8x8xf32>
    %48 = tpu.matmul %46, %47, %cst_21 {dimension_numbers = #tpu.dot_dimension_numbers<[1], [1], [0], [0], [0, 0, 1, 0], [], []>} : vector<8x8xbf16>, vector<8x8xbf16>, vector<8x8xf32> -> vector<8x8xf32>
    %49 = vector.broadcast %33 : vector<8x1xf32> to vector<8x8xf32>
    %50 = arith.mulf %49, %48 : vector<8x8xf32>
    %cst_22 = arith.constant 0.000000e+00 : f32
    %51 = vector.broadcast %cst_22 : f32 to vector<8x8xf32>
    %52 = arith.cmpf one, %50, %51 : vector<8x8xf32>
    %53 = arith.andi %43, %52 : vector<8x8xi1>
    %cst_23 = arith.constant 0xFF800000 : f32
    %54 = vector.broadcast %cst_23 : f32 to vector<8x8xf32>
    %55 = arith.select %53, %50, %54 : vector<8x8xi1>, vector<8x8xf32>
    %cst_24 = arith.constant dense<0xFF800000> : vector<8xf32>
    %56 = vector.multi_reduction <maximumf>, %55, %cst_24 [1] : vector<8x8xf32> to vector<8xf32>
    %57 = vector.shape_cast %56 : vector<8xf32> to vector<8x1xf32>
    %cst_25 = arith.constant 0xFF800000 : f32
    %58 = vector.broadcast %cst_25 : f32 to vector<8x1xf32>
    %59 = arith.cmpf oeq, %57, %58 : vector<8x1xf32>
    %cst_26 = arith.constant 0.000000e+00 : f32
    %60 = vector.broadcast %cst_26 : f32 to vector<8x1xf32>
    %61 = arith.select %59, %60, %57 : vector<8x1xi1>, vector<8x1xf32>
    %62 = vector.broadcast %61 : vector<8x1xf32> to vector<8x8xf32>
    %63 = arith.subf %55, %62 : vector<8x8xf32>
    %64 = math.exp %63 : vector<8x8xf32>
    %cst_27 = arith.constant dense<0.000000e+00> : vector<8xf32>
    %65 = vector.multi_reduction <add>, %64, %cst_27 [1] : vector<8x8xf32> to vector<8xf32>
    %66 = vector.shape_cast %65 : vector<8xf32> to vector<8x1xf32>
    %cst_28 = arith.constant 0.000000e+00 : f32
    %67 = vector.broadcast %cst_28 : f32 to vector<8x1xf32>
    %68 = arith.cmpf oeq, %66, %67 : vector<8x1xf32>
    %69 = tpu.reciprocal %66 {approx = true} : vector<8x1xf32> -> vector<8x1xf32>
    %cst_29 = arith.constant 0.000000e+00 : f32
    %70 = vector.broadcast %cst_29 : f32 to vector<8x1xf32>
    %71 = arith.select %68, %70, %69 : vector<8x1xi1>, vector<8x1xf32>
    %72 = vector.broadcast %71 : vector<8x1xf32> to vector<8x8xf32>
    %73 = arith.mulf %64, %72 : vector<8x8xf32>
    %74 = arith.truncf %73 : vector<8x8xf32> to vector<8x8xbf16>
    %75 = vector.extract_strided_slice %38 {offsets = [0, 0], sizes = [8, 8], strides = [1, 1]} : vector<8x32xbf16> to vector<8x8xbf16>
    %cst_30 = arith.constant dense<0.000000e+00> : vector<8x8xf32>
    %76 = tpu.matmul %74, %75, %cst_30 {dimension_numbers = #tpu.dot_dimension_numbers<[1], [0], [0], [1], [0, 0, 1, 1], [], []>} : vector<8x8xbf16>, vector<8x8xbf16>, vector<8x8xf32> -> vector<8x8xf32>
    %77 = arith.truncf %76 : vector<8x8xf32> to vector<8x8xbf16>
    %c0_31 = arith.constant 0 : index
    %c0_32 = arith.constant 0 : index
    %c0_33 = arith.constant 0 : index
    %78 = vector.load %arg8[%c0_31, %c0_32, %c0_33] : memref<4x8x32xbf16, #tpu.memory_space<vmem>>, vector<1x8x32xbf16>
    %79 = vector.shape_cast %78 : vector<1x8x32xbf16> to vector<8x32xbf16>
    %cst_34 = arith.constant dense<0.000000e+00> : vector<8x32xf32>
    %80 = tpu.matmul %77, %79, %cst_34 {dimension_numbers = #tpu.dot_dimension_numbers<[1], [0], [0], [1], [0, 0, 1, 1], [], []>} : vector<8x8xbf16>, vector<8x32xbf16>, vector<8x32xf32> -> vector<8x32xf32>
    %81 = arith.addf %44, %80 : vector<8x32xf32>
    %82 = vector.extract_strided_slice %36 {offsets = [0, 8], sizes = [8, 8], strides = [1, 1]} : vector<8x32xf32> to vector<8x8xf32>
    %83 = arith.truncf %82 : vector<8x8xf32> to vector<8x8xbf16>
    %84 = vector.extract_strided_slice %37 {offsets = [0, 8], sizes = [8, 8], strides = [1, 1]} : vector<8x32xbf16> to vector<8x8xbf16>
    %cst_35 = arith.constant dense<0.000000e+00> : vector<8x8xf32>
    %85 = tpu.matmul %83, %84, %cst_35 {dimension_numbers = #tpu.dot_dimension_numbers<[1], [1], [0], [0], [0, 0, 1, 0], [], []>} : vector<8x8xbf16>, vector<8x8xbf16>, vector<8x8xf32> -> vector<8x8xf32>
    %86 = vector.broadcast %33 : vector<8x1xf32> to vector<8x8xf32>
    %87 = arith.mulf %86, %85 : vector<8x8xf32>
    %cst_36 = arith.constant 0.000000e+00 : f32
    %88 = vector.broadcast %cst_36 : f32 to vector<8x8xf32>
    %89 = arith.cmpf one, %87, %88 : vector<8x8xf32>
    %90 = arith.andi %43, %89 : vector<8x8xi1>
    %cst_37 = arith.constant 0xFF800000 : f32
    %91 = vector.broadcast %cst_37 : f32 to vector<8x8xf32>
    %92 = arith.select %90, %87, %91 : vector<8x8xi1>, vector<8x8xf32>
    %cst_38 = arith.constant dense<0xFF800000> : vector<8xf32>
    %93 = vector.multi_reduction <maximumf>, %92, %cst_38 [1] : vector<8x8xf32> to vector<8xf32>
    %94 = vector.shape_cast %93 : vector<8xf32> to vector<8x1xf32>
    %cst_39 = arith.constant 0xFF800000 : f32
    %95 = vector.broadcast %cst_39 : f32 to vector<8x1xf32>
    %96 = arith.cmpf oeq, %94, %95 : vector<8x1xf32>
    %cst_40 = arith.constant 0.000000e+00 : f32
    %97 = vector.broadcast %cst_40 : f32 to vector<8x1xf32>
    %98 = arith.select %96, %97, %94 : vector<8x1xi1>, vector<8x1xf32>
    %99 = vector.broadcast %98 : vector<8x1xf32> to vector<8x8xf32>
    %100 = arith.subf %92, %99 : vector<8x8xf32>
    %101 = math.exp %100 : vector<8x8xf32>
    %cst_41 = arith.constant dense<0.000000e+00> : vector<8xf32>
    %102 = vector.multi_reduction <add>, %101, %cst_41 [1] : vector<8x8xf32> to vector<8xf32>
    %103 = vector.shape_cast %102 : vector<8xf32> to vector<8x1xf32>
    %cst_42 = arith.constant 0.000000e+00 : f32
    %104 = vector.broadcast %cst_42 : f32 to vector<8x1xf32>
    %105 = arith.cmpf oeq, %103, %104 : vector<8x1xf32>
    %106 = tpu.reciprocal %103 {approx = true} : vector<8x1xf32> -> vector<8x1xf32>
    %cst_43 = arith.constant 0.000000e+00 : f32
    %107 = vector.broadcast %cst_43 : f32 to vector<8x1xf32>
    %108 = arith.select %105, %107, %106 : vector<8x1xi1>, vector<8x1xf32>
    %109 = vector.broadcast %108 : vector<8x1xf32> to vector<8x8xf32>
    %110 = arith.mulf %101, %109 : vector<8x8xf32>
    %111 = arith.truncf %110 : vector<8x8xf32> to vector<8x8xbf16>
    %112 = vector.extract_strided_slice %38 {offsets = [0, 8], sizes = [8, 8], strides = [1, 1]} : vector<8x32xbf16> to vector<8x8xbf16>
    %cst_44 = arith.constant dense<0.000000e+00> : vector<8x8xf32>
    %113 = tpu.matmul %111, %112, %cst_44 {dimension_numbers = #tpu.dot_dimension_numbers<[1], [0], [0], [1], [0, 0, 1, 1], [], []>} : vector<8x8xbf16>, vector<8x8xbf16>, vector<8x8xf32> -> vector<8x8xf32>
    %114 = arith.truncf %113 : vector<8x8xf32> to vector<8x8xbf16>
    %c1 = arith.constant 1 : index
    %c0_45 = arith.constant 0 : index
    %c0_46 = arith.constant 0 : index
    %115 = vector.load %arg8[%c1, %c0_45, %c0_46] : memref<4x8x32xbf16, #tpu.memory_space<vmem>>, vector<1x8x32xbf16>
    %116 = vector.shape_cast %115 : vector<1x8x32xbf16> to vector<8x32xbf16>
    %cst_47 = arith.constant dense<0.000000e+00> : vector<8x32xf32>
    %117 = tpu.matmul %114, %116, %cst_47 {dimension_numbers = #tpu.dot_dimension_numbers<[1], [0], [0], [1], [0, 0, 1, 1], [], []>} : vector<8x8xbf16>, vector<8x32xbf16>, vector<8x32xf32> -> vector<8x32xf32>
    %118 = arith.addf %81, %117 : vector<8x32xf32>
    %119 = vector.extract_strided_slice %36 {offsets = [0, 16], sizes = [8, 8], strides = [1, 1]} : vector<8x32xf32> to vector<8x8xf32>
    %120 = arith.truncf %119 : vector<8x8xf32> to vector<8x8xbf16>
    %121 = vector.extract_strided_slice %37 {offsets = [0, 16], sizes = [8, 8], strides = [1, 1]} : vector<8x32xbf16> to vector<8x8xbf16>
    %cst_48 = arith.constant dense<0.000000e+00> : vector<8x8xf32>
    %122 = tpu.matmul %120, %121, %cst_48 {dimension_numbers = #tpu.dot_dimension_numbers<[1], [1], [0], [0], [0, 0, 1, 0], [], []>} : vector<8x8xbf16>, vector<8x8xbf16>, vector<8x8xf32> -> vector<8x8xf32>
    %123 = vector.broadcast %33 : vector<8x1xf32> to vector<8x8xf32>
    %124 = arith.mulf %123, %122 : vector<8x8xf32>
    %cst_49 = arith.constant 0.000000e+00 : f32
    %125 = vector.broadcast %cst_49 : f32 to vector<8x8xf32>
    %126 = arith.cmpf one, %124, %125 : vector<8x8xf32>
    %127 = arith.andi %43, %126 : vector<8x8xi1>
    %cst_50 = arith.constant 0xFF800000 : f32
    %128 = vector.broadcast %cst_50 : f32 to vector<8x8xf32>
    %129 = arith.select %127, %124, %128 : vector<8x8xi1>, vector<8x8xf32>
    %cst_51 = arith.constant dense<0xFF800000> : vector<8xf32>
    %130 = vector.multi_reduction <maximumf>, %129, %cst_51 [1] : vector<8x8xf32> to vector<8xf32>
    %131 = vector.shape_cast %130 : vector<8xf32> to vector<8x1xf32>
    %cst_52 = arith.constant 0xFF800000 : f32
    %132 = vector.broadcast %cst_52 : f32 to vector<8x1xf32>
    %133 = arith.cmpf oeq, %131, %132 : vector<8x1xf32>
    %cst_53 = arith.constant 0.000000e+00 : f32
    %134 = vector.broadcast %cst_53 : f32 to vector<8x1xf32>
    %135 = arith.select %133, %134, %131 : vector<8x1xi1>, vector<8x1xf32>
    %136 = vector.broadcast %135 : vector<8x1xf32> to vector<8x8xf32>
    %137 = arith.subf %129, %136 : vector<8x8xf32>
    %138 = math.exp %137 : vector<8x8xf32>
    %cst_54 = arith.constant dense<0.000000e+00> : vector<8xf32>
    %139 = vector.multi_reduction <add>, %138, %cst_54 [1] : vector<8x8xf32> to vector<8xf32>
    %140 = vector.shape_cast %139 : vector<8xf32> to vector<8x1xf32>
    %cst_55 = arith.constant 0.000000e+00 : f32
    %141 = vector.broadcast %cst_55 : f32 to vector<8x1xf32>
    %142 = arith.cmpf oeq, %140, %141 : vector<8x1xf32>
    %143 = tpu.reciprocal %140 {approx = true} : vector<8x1xf32> -> vector<8x1xf32>
    %cst_56 = arith.constant 0.000000e+00 : f32
    %144 = vector.broadcast %cst_56 : f32 to vector<8x1xf32>
    %145 = arith.select %142, %144, %143 : vector<8x1xi1>, vector<8x1xf32>
    %146 = vector.broadcast %145 : vector<8x1xf32> to vector<8x8xf32>
    %147 = arith.mulf %138, %146 : vector<8x8xf32>
    %148 = arith.truncf %147 : vector<8x8xf32> to vector<8x8xbf16>
    %149 = vector.extract_strided_slice %38 {offsets = [0, 16], sizes = [8, 8], strides = [1, 1]} : vector<8x32xbf16> to vector<8x8xbf16>
    %cst_57 = arith.constant dense<0.000000e+00> : vector<8x8xf32>
    %150 = tpu.matmul %148, %149, %cst_57 {dimension_numbers = #tpu.dot_dimension_numbers<[1], [0], [0], [1], [0, 0, 1, 1], [], []>} : vector<8x8xbf16>, vector<8x8xbf16>, vector<8x8xf32> -> vector<8x8xf32>
    %151 = arith.truncf %150 : vector<8x8xf32> to vector<8x8xbf16>
    %c2 = arith.constant 2 : index
    %c0_58 = arith.constant 0 : index
    %c0_59 = arith.constant 0 : index
    %152 = vector.load %arg8[%c2, %c0_58, %c0_59] : memref<4x8x32xbf16, #tpu.memory_space<vmem>>, vector<1x8x32xbf16>
    %153 = vector.shape_cast %152 : vector<1x8x32xbf16> to vector<8x32xbf16>
    %cst_60 = arith.constant dense<0.000000e+00> : vector<8x32xf32>
    %154 = tpu.matmul %151, %153, %cst_60 {dimension_numbers = #tpu.dot_dimension_numbers<[1], [0], [0], [1], [0, 0, 1, 1], [], []>} : vector<8x8xbf16>, vector<8x32xbf16>, vector<8x32xf32> -> vector<8x32xf32>
    %155 = arith.addf %118, %154 : vector<8x32xf32>
    %156 = vector.extract_strided_slice %36 {offsets = [0, 24], sizes = [8, 8], strides = [1, 1]} : vector<8x32xf32> to vector<8x8xf32>
    %157 = arith.truncf %156 : vector<8x8xf32> to vector<8x8xbf16>
    %158 = vector.extract_strided_slice %37 {offsets = [0, 24], sizes = [8, 8], strides = [1, 1]} : vector<8x32xbf16> to vector<8x8xbf16>
    %cst_61 = arith.constant dense<0.000000e+00> : vector<8x8xf32>
    %159 = tpu.matmul %157, %158, %cst_61 {dimension_numbers = #tpu.dot_dimension_numbers<[1], [1], [0], [0], [0, 0, 1, 0], [], []>} : vector<8x8xbf16>, vector<8x8xbf16>, vector<8x8xf32> -> vector<8x8xf32>
    %160 = vector.broadcast %33 : vector<8x1xf32> to vector<8x8xf32>
    %161 = arith.mulf %160, %159 : vector<8x8xf32>
    %cst_62 = arith.constant 0.000000e+00 : f32
    %162 = vector.broadcast %cst_62 : f32 to vector<8x8xf32>
    %163 = arith.cmpf one, %161, %162 : vector<8x8xf32>
    %164 = arith.andi %43, %163 : vector<8x8xi1>
    %cst_63 = arith.constant 0xFF800000 : f32
    %165 = vector.broadcast %cst_63 : f32 to vector<8x8xf32>
    %166 = arith.select %164, %161, %165 : vector<8x8xi1>, vector<8x8xf32>
    %cst_64 = arith.constant dense<0xFF800000> : vector<8xf32>
    %167 = vector.multi_reduction <maximumf>, %166, %cst_64 [1] : vector<8x8xf32> to vector<8xf32>
    %168 = vector.shape_cast %167 : vector<8xf32> to vector<8x1xf32>
    %cst_65 = arith.constant 0xFF800000 : f32
    %169 = vector.broadcast %cst_65 : f32 to vector<8x1xf32>
    %170 = arith.cmpf oeq, %168, %169 : vector<8x1xf32>
    %cst_66 = arith.constant 0.000000e+00 : f32
    %171 = vector.broadcast %cst_66 : f32 to vector<8x1xf32>
    %172 = arith.select %170, %171, %168 : vector<8x1xi1>, vector<8x1xf32>
    %173 = vector.broadcast %172 : vector<8x1xf32> to vector<8x8xf32>
    %174 = arith.subf %166, %173 : vector<8x8xf32>
    %175 = math.exp %174 : vector<8x8xf32>
    %cst_67 = arith.constant dense<0.000000e+00> : vector<8xf32>
    %176 = vector.multi_reduction <add>, %175, %cst_67 [1] : vector<8x8xf32> to vector<8xf32>
    %177 = vector.shape_cast %176 : vector<8xf32> to vector<8x1xf32>
    %cst_68 = arith.constant 0.000000e+00 : f32
    %178 = vector.broadcast %cst_68 : f32 to vector<8x1xf32>
    %179 = arith.cmpf oeq, %177, %178 : vector<8x1xf32>
    %180 = tpu.reciprocal %177 {approx = true} : vector<8x1xf32> -> vector<8x1xf32>
    %cst_69 = arith.constant 0.000000e+00 : f32
    %181 = vector.broadcast %cst_69 : f32 to vector<8x1xf32>
    %182 = arith.select %179, %181, %180 : vector<8x1xi1>, vector<8x1xf32>
    %183 = vector.broadcast %182 : vector<8x1xf32> to vector<8x8xf32>
    %184 = arith.mulf %175, %183 : vector<8x8xf32>
    %185 = arith.truncf %184 : vector<8x8xf32> to vector<8x8xbf16>
    %186 = vector.extract_strided_slice %38 {offsets = [0, 24], sizes = [8, 8], strides = [1, 1]} : vector<8x32xbf16> to vector<8x8xbf16>
    %cst_70 = arith.constant dense<0.000000e+00> : vector<8x8xf32>
    %187 = tpu.matmul %185, %186, %cst_70 {dimension_numbers = #tpu.dot_dimension_numbers<[1], [0], [0], [1], [0, 0, 1, 1], [], []>} : vector<8x8xbf16>, vector<8x8xbf16>, vector<8x8xf32> -> vector<8x8xf32>
    %188 = arith.truncf %187 : vector<8x8xf32> to vector<8x8xbf16>
    %c3 = arith.constant 3 : index
    %c0_71 = arith.constant 0 : index
    %c0_72 = arith.constant 0 : index
    %189 = vector.load %arg8[%c3, %c0_71, %c0_72] : memref<4x8x32xbf16, #tpu.memory_space<vmem>>, vector<1x8x32xbf16>
    %190 = vector.shape_cast %189 : vector<1x8x32xbf16> to vector<8x32xbf16>
    %cst_73 = arith.constant dense<0.000000e+00> : vector<8x32xf32>
    %191 = tpu.matmul %188, %190, %cst_73 {dimension_numbers = #tpu.dot_dimension_numbers<[1], [0], [0], [1], [0, 0, 1, 1], [], []>} : vector<8x8xbf16>, vector<8x32xbf16>, vector<8x32xf32> -> vector<8x32xf32>
    %192 = arith.addf %155, %191 : vector<8x32xf32>
    %193 = arith.addf %7, %192 : vector<8x32xf32>
    %c0_74 = arith.constant 0 : index
    %c0_75 = arith.constant 0 : index
    %194 = vector.load %arg9[%c0_74, %c0_75] : memref<1x32xf32, #tpu.memory_space<vmem>>, vector<1x32xf32>
    %195 = vector.broadcast %194 : vector<1x32xf32> to vector<8x32xf32>
    %196 = arith.addf %193, %195 : vector<8x32xf32>
    %c0_76 = arith.constant 0 : index
    %c0_77 = arith.constant 0 : index
    %197 = vector.load %arg10[%c0_76, %c0_77] : memref<1x32xf32, #tpu.memory_space<vmem>>, vector<1x32xf32>
    %c0_78 = arith.constant 0 : index
    %c0_79 = arith.constant 0 : index
    %198 = vector.load %arg11[%c0_78, %c0_79] : memref<1x32xf32, #tpu.memory_space<vmem>>, vector<1x32xf32>
    %cst_80 = arith.constant dense<0.000000e+00> : vector<8xf32>
    %199 = vector.multi_reduction <add>, %196, %cst_80 [1] : vector<8x32xf32> to vector<8xf32>
    %200 = vector.shape_cast %199 : vector<8xf32> to vector<8x1xf32>
    %cst_81 = arith.constant 3.200000e+01 : f32
    %201 = vector.broadcast %cst_81 : f32 to vector<8x1xf32>
    %202 = arith.divf %200, %201 : vector<8x1xf32>
    %203 = vector.broadcast %202 : vector<8x1xf32> to vector<8x32xf32>
    %204 = arith.subf %196, %203 : vector<8x32xf32>
    %205 = arith.mulf %204, %204 : vector<8x32xf32>
    %cst_82 = arith.constant dense<0.000000e+00> : vector<8xf32>
    %206 = vector.multi_reduction <add>, %205, %cst_82 [1] : vector<8x32xf32> to vector<8xf32>
    %207 = vector.shape_cast %206 : vector<8xf32> to vector<8x1xf32>
    %cst_83 = arith.constant 3.200000e+01 : f32
    %208 = vector.broadcast %cst_83 : f32 to vector<8x1xf32>
    %209 = arith.divf %207, %208 : vector<8x1xf32>
    %210 = vector.broadcast %202 : vector<8x1xf32> to vector<8x32xf32>
    %211 = arith.subf %196, %210 : vector<8x32xf32>
    %cst_84 = arith.constant 9.99999974E-6 : f32
    %212 = vector.broadcast %cst_84 : f32 to vector<8x1xf32>
    %213 = arith.addf %209, %212 : vector<8x1xf32>
    %214 = math.rsqrt %213 : vector<8x1xf32>
    %215 = vector.broadcast %214 : vector<8x1xf32> to vector<8x32xf32>
    %216 = arith.mulf %211, %215 : vector<8x32xf32>
    %217 = vector.broadcast %197 : vector<1x32xf32> to vector<8x32xf32>
    %218 = arith.mulf %216, %217 : vector<8x32xf32>
    %219 = vector.broadcast %198 : vector<1x32xf32> to vector<8x32xf32>
    %220 = arith.addf %218, %219 : vector<8x32xf32>
    %221 = arith.truncf %220 : vector<8x32xf32> to vector<8x32xbf16>
    %c0_85 = arith.constant 0 : index
    %c0_86 = arith.constant 0 : index
    %222 = vector.load %arg12[%c0_85, %c0_86] : memref<32x128xbf16, #tpu.memory_space<vmem>>, vector<32x128xbf16>
    %cst_87 = arith.constant dense<0.000000e+00> : vector<8x128xf32>
    %223 = tpu.matmul %221, %222, %cst_87 {dimension_numbers = #tpu.dot_dimension_numbers<[1], [0], [0], [1], [0, 0, 1, 1], [], []>} : vector<8x32xbf16>, vector<32x128xbf16>, vector<8x128xf32> -> vector<8x128xf32>
    %c0_88 = arith.constant 0 : index
    %c0_89 = arith.constant 0 : index
    %224 = vector.load %arg13[%c0_88, %c0_89] : memref<1x128xf32, #tpu.memory_space<vmem>>, vector<1x128xf32>
    %225 = vector.broadcast %224 : vector<1x128xf32> to vector<8x128xf32>
    %226 = arith.addf %223, %225 : vector<8x128xf32>
    %cst_90 = arith.constant 0.000000e+00 : f32
    %227 = vector.broadcast %cst_90 : f32 to vector<8x128xf32>
    %228 = arith.maximumf %226, %227 : vector<8x128xf32>
    %229 = arith.truncf %228 : vector<8x128xf32> to vector<8x128xbf16>
    %c0_91 = arith.constant 0 : index
    %c0_92 = arith.constant 0 : index
    %230 = vector.load %arg14[%c0_91, %c0_92] : memref<128x32xbf16, #tpu.memory_space<vmem>>, vector<128x32xbf16>
    %cst_93 = arith.constant dense<0.000000e+00> : vector<8x32xf32>
    %231 = tpu.matmul %229, %230, %cst_93 {dimension_numbers = #tpu.dot_dimension_numbers<[1], [0], [0], [1], [0, 0, 1, 1], [], []>} : vector<8x128xbf16>, vector<128x32xbf16>, vector<8x32xf32> -> vector<8x32xf32>
    %c0_94 = arith.constant 0 : index
    %c0_95 = arith.constant 0 : index
    %232 = vector.load %arg15[%c0_94, %c0_95] : memref<1x32xf32, #tpu.memory_space<vmem>>, vector<1x32xf32>
    %233 = vector.broadcast %232 : vector<1x32xf32> to vector<8x32xf32>
    %234 = arith.addf %231, %233 : vector<8x32xf32>
    %235 = arith.addf %196, %234 : vector<8x32xf32>
    %c0_96 = arith.constant 0 : index
    %c0_97 = arith.constant 0 : index
    %c0_98 = arith.constant 0 : index
    %236 = vector.load %arg16[%c0_96, %c0_97, %c0_98] : memref<1x8x32xf32, #tpu.memory_space<vmem>>, vector<1x8x32xf32>
    %237 = vector.shape_cast %236 : vector<1x8x32xf32> to vector<8x32xf32>
    %238 = vector.shape_cast %235 : vector<8x32xf32> to vector<1x8x32xf32>
    tpu.vector_store %arg16[%c0_96, %c0_97, %c0_98], %238 {strides = array<i32>} : memref<1x8x32xf32, #tpu.memory_space<vmem>>, vector<1x8x32xf32>,
    return
  }
  func.func @transform_0(%arg0: i32, %arg1: i32) -> (i32, i32, i32) {
    %c0_i32 = arith.constant 0 : i32
    %c0_i32_0 = arith.constant 0 : i32
    %c0_i32_1 = arith.constant 0 : i32
    return %arg0, %c0_i32, %c0_i32_0 : i32, i32, i32
  }
  func.func @transform_1(%arg0: i32, %arg1: i32) -> (i32, i32, i32) {
    %c0_i32 = arith.constant 0 : i32
    %c0_i32_0 = arith.constant 0 : i32
    return %arg0, %arg1, %c0_i32 : i32, i32, i32
  }
  func.func @transform_2(%arg0: i32, %arg1: i32) -> (i32, i32) {
    %c0_i32 = arith.constant 0 : i32
    %c0_i32_0 = arith.constant 0 : i32
    %c0_i32_1 = arith.constant 0 : i32
    return %c0_i32, %c0_i32_0 : i32, i32
  }
  func.func @transform_3(%arg0: i32, %arg1: i32) -> (i32, i32) {
    %c0_i32 = arith.constant 0 : i32
    %c0_i32_0 = arith.constant 0 : i32
    %c0_i32_1 = arith.constant 0 : i32
    return %c0_i32, %c0_i32_0 : i32, i32
  }
  func.func @transform_4(%arg0: i32, %arg1: i32) -> (i32, i32) {
    %c0_i32 = arith.constant 0 : i32
    %c0_i32_0 = arith.constant 0 : i32
    %c0_i32_1 = arith.constant 0 : i32
    return %c0_i32, %c0_i32_0 : i32, i32
  }
  func.func @transform_5(%arg0: i32, %arg1: i32) -> (i32, i32) {
    %c0_i32 = arith.constant 0 : i32
    %c0_i32_0 = arith.constant 0 : i32
    %c0_i32_1 = arith.constant 0 : i32
    return %c0_i32, %c0_i32_0 : i32, i32
  }
  func.func @transform_6(%arg0: i32, %arg1: i32) -> (i32, i32, i32) {
    %c0_i32 = arith.constant 0 : i32
    %c0_i32_0 = arith.constant 0 : i32
    %c0_i32_1 = arith.constant 0 : i32
    %c0_i32_2 = arith.constant 0 : i32
    return %c0_i32, %c0_i32_0, %c0_i32_1 : i32, i32, i32
  }
  func.func @transform_7(%arg0: i32, %arg1: i32) -> (i32, i32) {
    %c0_i32 = arith.constant 0 : i32
    %c0_i32_0 = arith.constant 0 : i32
    %c0_i32_1 = arith.constant 0 : i32
    return %c0_i32, %c0_i32_0 : i32, i32
  }
  func.func @transform_8(%arg0: i32, %arg1: i32) -> (i32, i32) {
    %c0_i32 = arith.constant 0 : i32
    %c0_i32_0 = arith.constant 0 : i32
    %c0_i32_1 = arith.constant 0 : i32
    return %c0_i32, %c0_i32_0 : i32, i32
  }
  func.func @transform_9(%arg0: i32, %arg1: i32) -> (i32, i32) {
    %c0_i32 = arith.constant 0 : i32
    %c0_i32_0 = arith.constant 0 : i32
    %c0_i32_1 = arith.constant 0 : i32
    return %c0_i32, %c0_i32_0 : i32, i32
  }
  func.func @transform_10(%arg0: i32, %arg1: i32) -> (i32, i32) {
    %c0_i32 = arith.constant 0 : i32
    %c0_i32_0 = arith.constant 0 : i32
    %c0_i32_1 = arith.constant 0 : i32
    return %c0_i32, %c0_i32_0 : i32, i32
  }
  func.func @transform_11(%arg0: i32, %arg1: i32) -> (i32, i32) {
    %c0_i32 = arith.constant 0 : i32
    %c0_i32_0 = arith.constant 0 : i32
    %c0_i32_1 = arith.constant 0 : i32
    return %c0_i32, %c0_i32_0 : i32, i32
  }
  func.func @transform_12(%arg0: i32, %arg1: i32) -> (i32, i32) {
    %c0_i32 = arith.constant 0 : i32
    %c0_i32_0 = arith.constant 0 : i32
    %c0_i32_1 = arith.constant 0 : i32
    return %c0_i32, %c0_i32_0 : i32, i32
  }
  func.func @transform_13(%arg0: i32, %arg1: i32) -> (i32, i32) {
    %c0_i32 = arith.constant 0 : i32
    %c0_i32_0 = arith.constant 0 : i32
    %c0_i32_1 = arith.constant 0 : i32
    return %c0_i32, %c0_i32_0 : i32, i32
  }
  func.func @transform_14(%arg0: i32, %arg1: i32) -> (i32, i32, i32) {
    %c0_i32 = arith.constant 0 : i32
    %c0_i32_0 = arith.constant 0 : i32
    return %arg0, %arg1, %c0_i32 : i32, i32, i32
  }
}

</mosaic_0001>

<llo_original>
// kernel: tpu_custom_call.1
$region0: #{tpu_custom_call.1}
  #allocation0 [shape = 'u32[]', space=smem, size = 0x4, offset = 0x4, fixed_abs, tag = 'smem constant byte address 0x4 - core index']
  #allocation1 [shape = 'u32[72,128]{1,0:T(1,128)}', space=vmem, size = 0x9000, scoped, tag = 'internal scratch']
  #allocation2 [shape = 'bf16[8,32]{1,0:T(8,128)(2,1)}', space=vmem, size = 0x800, scoped, tag = 'scratch operand']
  #allocation3 [shape = 'bf16[8,32]{1,0:T(8,128)(2,1)}', space=vmem, size = 0x800, scoped, tag = 'scratch operand']
  %s0 = inlined_call_operand.vmem [shape: f32[2,8,32], index: 0, kind: input, shape index: {}]
  %s1 = inlined_call_operand.vmem [shape: f32[2,8,1], index: 1, kind: input, shape index: {}]
  %s2 = inlined_call_operand.vmem [shape: f32[1,32], index: 2, kind: input, shape index: {}]
  %s3 = inlined_call_operand.vmem [shape: f32[1,32], index: 3, kind: input, shape index: {}]
  %s4 = inlined_call_operand.vmem [shape: bf16[32,32], index: 4, kind: input, shape index: {}]
  %s5 = inlined_call_operand.vmem [shape: bf16[32,64], index: 5, kind: input, shape index: {}]
  %s6 = inlined_call_operand.vmem [shape: bf16[4,8,32], index: 6, kind: input, shape index: {}]
  %s7 = inlined_call_operand.vmem [shape: f32[1,32], index: 7, kind: input, shape index: {}]
  %s8 = inlined_call_operand.vmem [shape: f32[1,32], index: 8, kind: input, shape index: {}]
  %s9 = inlined_call_operand.vmem [shape: f32[1,32], index: 9, kind: input, shape index: {}]
  %s10 = inlined_call_operand.vmem [shape: bf16[32,128], index: 10, kind: input, shape index: {}]
  %s11 = inlined_call_operand.vmem [shape: f32[1,128], index: 11, kind: input, shape index: {}]
  %s12 = inlined_call_operand.vmem [shape: bf16[128,32], index: 12, kind: input, shape index: {}]
  %s13 = inlined_call_operand.vmem [shape: f32[1,32], index: 13, kind: input, shape index: {}]
  %s14 = inlined_call_operand.hbm [shape: f32[2,8,32], index: 14, kind: output, shape index: {}]
  %s15 = sld [smem:[#allocation0]]
  $region93: #{tpu_custom_call.1} parent=0
    _
  %s17 = ssub.s32 1, %s15
  %s18 = scalar_select 0, %s17, %s15
  $region1: #{tpu_custom_call.1} parent=0
    #allocation4 [shape = 'u8[8192]{0}', space=vmem, size = 0x2000, scoped, tag = 'output window, operand 0']
    #allocation5 [shape = 's32[2]{0}', space=sflag, size = 0x8, scoped, tag = 'scoped memory for tpu_custom_call.1']
    %19 = vsyncpa [#allocation5], 0
    %s20 = scalar_lea.sflag [#allocation5], 1
    %21 = vsyncpa %s20, 0
    loop: start=0, step=1, limit=4
    $region2: #{tpu_custom_call.1} parent=1 // loop_pre_header
      _
    $region3: #{tpu_custom_call.1} parent=1 // loop_header
      %s23 = sphi 0, %s27
      %p24 = scmp.ge.s32.totalorder %s23, 4
      %s30 = sphi 0, %s42
      %s31 = sphi 0, %s38
      %s32 = sphi 0, %s30
      %s33 = sphi 0, %s31
      %s34 = sphi 0, %s32
      %s35 = sphi 0, %s33
      %s45 = sphi 0, %s47
      %s48 = sphi 0, %s45
      %s49 = sphi 0, %s48
      %s65 = sphi 0, %s49
      %s73 = sphi 0, %s75
      %s76 = sphi 0, %s73
      %s77 = sphi 0, %s76
      %s93 = sphi 0, %s77
      %s97 = sphi 0, %s97
      %s99 = sphi 0, %s97
      %s100 = sphi 0, %s99
      %s114 = sphi 0, %s100
      %s118 = sphi 0, %s118
      %s120 = sphi 0, %s118
      %s121 = sphi 0, %s120
      %s135 = sphi 0, %s121
      %s139 = sphi 0, %s139
      %s141 = sphi 0, %s139
      %s142 = sphi 0, %s141
      %s156 = sphi 0, %s142
      %s160 = sphi 0, %s160
      %s162 = sphi 0, %s160
      %s163 = sphi 0, %s162
      %s177 = sphi 0, %s163
      %s181 = sphi 0, %s181
      %s183 = sphi 0, %s181
      %s184 = sphi 0, %s183
      %s198 = sphi 0, %s184
      %s202 = sphi 0, %s202
      %s204 = sphi 0, %s202
      %s205 = sphi 0, %s204
      %s219 = sphi 0, %s205
      %s223 = sphi 0, %s223
      %s225 = sphi 0, %s223
      %s226 = sphi 0, %s225
      %s240 = sphi 0, %s226
      %s244 = sphi 0, %s244
      %s246 = sphi 0, %s244
      %s247 = sphi 0, %s246
      %s261 = sphi 0, %s247
      %s265 = sphi 0, %s265
      %s267 = sphi 0, %s265
      %s268 = sphi 0, %s267
      %s282 = sphi 0, %s268
      %s286 = sphi 0, %s286
      %s288 = sphi 0, %s286
      %s289 = sphi 0, %s288
      %s303 = sphi 0, %s289
      %s307 = sphi 0, %s307
      %s309 = sphi 0, %s307
      %s310 = sphi 0, %s309
      %s324 = sphi 0, %s310
      %s328 = sphi 0, %s328
      %s330 = sphi 0, %s328
      %s331 = sphi 0, %s330
      %s345 = sphi 0, %s331
      %s353 = sphi 0, %s355
      %s356 = sphi 0, %s353
      %s357 = sphi 0, %s356
      %s373 = sphi 0, %s357
    $region4: #{tpu_custom_call.1} parent=1 // loop_header_branch
      %26 = sbr.rel (%p24) target = $region8
    $region5: #{tpu_custom_call.1} parent=1 // loop_body
      %s28 = ssub.s32 %s23, 1
      %s29 = ssub.s32 %s23, 2
      %s36 = sadd.s32 1, %s31
      %p37 = scmp.ge.s32.totalorder %s36, 1
      %s38 = scalar_select %p37, 0, %s36
      %s39 = sadd.s32 1, %s30
      %s40 = scalar_select %p37, %s39, %s30
      %p41 = scmp.ge.s32.totalorder %s40, 2
      %s42 = scalar_select %p41, 0, %s40
      %s43 = ssub.s32 %s30, %s42
      %p44 = scmp.eq.s32.totalorder %s43, 0
      %s46 = sadd.s32 %s45, 1
      %s47 = scalar_select %p44, %s45, %s46
      %p50 = pneg %p44
      %p51 = scmp.eq.s32.totalorder %s23, 1
      %p52 = por %p50, %p51
      %p53 = scmp.ne.s32.totalorder %s45, %s48
      %p54 = scmp.eq.s32.totalorder %s23, 0
      %p55 = por %p53, %p54
      %p56 = scmp.ne.s32.totalorder %s45, %s48
      %p57 = scmp.eq.s32.totalorder %s28, 1
      %p58 = por %p56, %p57
      %p59 = scmp.ne.s32.totalorder %s48, %s49
      %p60 = scmp.eq.s32.totalorder %s28, 0
      %p61 = por %p59, %p60
      %p62 = scmp.ne.s32.totalorder %s48, %s49
      %p63 = scmp.eq.s32.totalorder %s29, 1
      %p64 = por %p62, %p63
      %p66 = scmp.ne.s32.totalorder %s49, %s65
      %p67 = scmp.eq.s32.totalorder %s29, 0
      %p68 = por %p66, %p67
      %s69 = ssub.s32 %s30, %s42
      %s70 = ssub.s32 %s31, %s38
      %s71 = sor.u32 %s69, %s70
      %p72 = scmp.eq.s32.totalorder %s71, 0
      %s74 = sadd.s32 %s73, 1
      %s75 = scalar_select %p72, %s73, %s74
      %p78 = pneg %p72
      %p79 = scmp.eq.s32.totalorder %s23, 1
      %p80 = por %p78, %p79
      %p81 = scmp.ne.s32.totalorder %s73, %s76
      %p82 = scmp.eq.s32.totalorder %s23, 0
      %p83 = por %p81, %p82
      %p84 = scmp.ne.s32.totalorder %s73, %s76
      %p85 = scmp.eq.s32.totalorder %s28, 1
      %p86 = por %p84, %p85
      %p87 = scmp.ne.s32.totalorder %s76, %s77
      %p88 = scmp.eq.s32.totalorder %s28, 0
      %p89 = por %p87, %p88
      %p90 = scmp.ne.s32.totalorder %s76, %s77
      %p91 = scmp.eq.s32.totalorder %s29, 1
      %p92 = por %p90, %p91
      %p94 = scmp.ne.s32.totalorder %s77, %s93
      %p95 = scmp.eq.s32.totalorder %s29, 0
      %p96 = por %p94, %p95
      %s98 = sadd.s32 %s97, 1
      %p101 = scmp.eq.s32.totalorder %s23, 1
      %p102 = scmp.ne.s32.totalorder %s97, %s99
      %p103 = scmp.eq.s32.totalorder %s23, 0
      %p104 = por %p102, %p103
      %p105 = scmp.ne.s32.totalorder %s97, %s99
      %p106 = scmp.eq.s32.totalorder %s28, 1
      %p107 = por %p105, %p106
      %p108 = scmp.ne.s32.totalorder %s99, %s100
      %p109 = scmp.eq.s32.totalorder %s28, 0
      %p110 = por %p108, %p109
      %p111 = scmp.ne.s32.totalorder %s99, %s100
      %p112 = scmp.eq.s32.totalorder %s29, 1
      %p113 = por %p111, %p112
      %p115 = scmp.ne.s32.totalorder %s100, %s114
      %p116 = scmp.eq.s32.totalorder %s29, 0
      %p117 = por %p115, %p116
      %s119 = sadd.s32 %s118, 1
      %p122 = scmp.eq.s32.totalorder %s23, 1
      %p123 = scmp.ne.s32.totalorder %s118, %s120
      %p124 = scmp.eq.s32.totalorder %s23, 0
      %p125 = por %p123, %p124
      %p126 = scmp.ne.s32.totalorder %s118, %s120
      %p127 = scmp.eq.s32.totalorder %s28, 1
      %p128 = por %p126, %p127
      %p129 = scmp.ne.s32.totalorder %s120, %s121
      %p130 = scmp.eq.s32.totalorder %s28, 0
      %p131 = por %p129, %p130
      %p132 = scmp.ne.s32.totalorder %s120, %s121
      %p133 = scmp.eq.s32.totalorder %s29, 1
      %p134 = por %p132, %p133
      %p136 = scmp.ne.s32.totalorder %s121, %s135
      %p137 = scmp.eq.s32.totalorder %s29, 0
      %p138 = por %p136, %p137
      %s140 = sadd.s32 %s139, 1
      %p143 = scmp.eq.s32.totalorder %s23, 1
      %p144 = scmp.ne.s32.totalorder %s139, %s141
      %p145 = scmp.eq.s32.totalorder %s23, 0
      %p146 = por %p144, %p145
      %p147 = scmp.ne.s32.totalorder %s139, %s141
      %p148 = scmp.eq.s32.totalorder %s28, 1
      %p149 = por %p147, %p148
      %p150 = scmp.ne.s32.totalorder %s141, %s142
      %p151 = scmp.eq.s32.totalorder %s28, 0
      %p152 = por %p150, %p151
      %p153 = scmp.ne.s32.totalorder %s141, %s142
      %p154 = scmp.eq.s32.totalorder %s29, 1
      %p155 = por %p153, %p154
      %p157 = scmp.ne.s32.totalorder %s142, %s156
      %p158 = scmp.eq.s32.totalorder %s29, 0
      %p159 = por %p157, %p158
      %s161 = sadd.s32 %s160, 1
      %p164 = scmp.eq.s32.totalorder %s23, 1
      %p165 = scmp.ne.s32.totalorder %s160, %s162
      %p166 = scmp.eq.s32.totalorder %s23, 0
      %p167 = por %p165, %p166
      %p168 = scmp.ne.s32.totalorder %s160, %s162
      %p169 = scmp.eq.s32.totalorder %s28, 1
      %p170 = por %p168, %p169
      %p171 = scmp.ne.s32.totalorder %s162, %s163
      %p172 = scmp.eq.s32.totalorder %s28, 0
      %p173 = por %p171, %p172
      %p174 = scmp.ne.s32.totalorder %s162, %s163
      %p175 = scmp.eq.s32.totalorder %s29, 1
      %p176 = por %p174, %p175
      %p178 = scmp.ne.s32.totalorder %s163, %s177
      %p179 = scmp.eq.s32.totalorder %s29, 0
      %p180 = por %p178, %p179
      %s182 = sadd.s32 %s181, 1
      %p185 = scmp.eq.s32.totalorder %s23, 1
      %p186 = scmp.ne.s32.totalorder %s181, %s183
      %p187 = scmp.eq.s32.totalorder %s23, 0
      %p188 = por %p186, %p187
      %p189 = scmp.ne.s32.totalorder %s181, %s183
      %p190 = scmp.eq.s32.totalorder %s28, 1
      %p191 = por %p189, %p190
      %p192 = scmp.ne.s32.totalorder %s183, %s184
      %p193 = scmp.eq.s32.totalorder %s28, 0
      %p194 = por %p192, %p193
      %p195 = scmp.ne.s32.totalorder %s183, %s184
      %p196 = scmp.eq.s32.totalorder %s29, 1
      %p197 = por %p195, %p196
      %p199 = scmp.ne.s32.totalorder %s184, %s198
      %p200 = scmp.eq.s32.totalorder %s29, 0
      %p201 = por %p199, %p200
      %s203 = sadd.s32 %s202, 1
      %p206 = scmp.eq.s32.totalorder %s23, 1
      %p207 = scmp.ne.s32.totalorder %s202, %s204
      %p208 = scmp.eq.s32.totalorder %s23, 0
      %p209 = por %p207, %p208
      %p210 = scmp.ne.s32.totalorder %s202, %s204
      %p211 = scmp.eq.s32.totalorder %s28, 1
      %p212 = por %p210, %p211
      %p213 = scmp.ne.s32.totalorder %s204, %s205
      %p214 = scmp.eq.s32.totalorder %s28, 0
      %p215 = por %p213, %p214
      %p216 = scmp.ne.s32.totalorder %s204, %s205
      %p217 = scmp.eq.s32.totalorder %s29, 1
      %p218 = por %p216, %p217
      %p220 = scmp.ne.s32.totalorder %s205, %s219
      %p221 = scmp.eq.s32.totalorder %s29, 0
      %p222 = por %p220, %p221
      %s224 = sadd.s32 %s223, 1
      %p227 = scmp.eq.s32.totalorder %s23, 1
      %p228 = scmp.ne.s32.totalorder %s223, %s225
      %p229 = scmp.eq.s32.totalorder %s23, 0
      %p230 = por %p228, %p229
      %p231 = scmp.ne.s32.totalorder %s223, %s225
      %p232 = scmp.eq.s32.totalorder %s28, 1
      %p233 = por %p231, %p232
      %p234 = scmp.ne.s32.totalorder %s225, %s226
      %p235 = scmp.eq.s32.totalorder %s28, 0
      %p236 = por %p234, %p235
      %p237 = scmp.ne.s32.totalorder %s225, %s226
      %p238 = scmp.eq.s32.totalorder %s29, 1
      %p239 = por %p237, %p238
      %p241 = scmp.ne.s32.totalorder %s226, %s240
      %p242 = scmp.eq.s32.totalorder %s29, 0
      %p243 = por %p241, %p242
      %s245 = sadd.s32 %s244, 1
      %p248 = scmp.eq.s32.totalorder %s23, 1
      %p249 = scmp.ne.s32.totalorder %s244, %s246
      %p250 = scmp.eq.s32.totalorder %s23, 0
      %p251 = por %p249, %p250
      %p252 = scmp.ne.s32.totalorder %s244, %s246
      %p253 = scmp.eq.s32.totalorder %s28, 1
      %p254 = por %p252, %p253
      %p255 = scmp.ne.s32.totalorder %s246, %s247
      %p256 = scmp.eq.s32.totalorder %s28, 0
      %p257 = por %p255, %p256
      %p258 = scmp.ne.s32.totalorder %s246, %s247
      %p259 = scmp.eq.s32.totalorder %s29, 1
      %p260 = por %p258, %p259
      %p262 = scmp.ne.s32.totalorder %s247, %s261
      %p263 = scmp.eq.s32.totalorder %s29, 0
      %p264 = por %p262, %p263
      %s266 = sadd.s32 %s265, 1
      %p269 = scmp.eq.s32.totalorder %s23, 1
      %p270 = scmp.ne.s32.totalorder %s265, %s267
      %p271 = scmp.eq.s32.totalorder %s23, 0
      %p272 = por %p270, %p271
      %p273 = scmp.ne.s32.totalorder %s265, %s267
      %p274 = scmp.eq.s32.totalorder %s28, 1
      %p275 = por %p273, %p274
      %p276 = scmp.ne.s32.totalorder %s267, %s268
      %p277 = scmp.eq.s32.totalorder %s28, 0
      %p278 = por %p276, %p277
      %p279 = scmp.ne.s32.totalorder %s267, %s268
      %p280 = scmp.eq.s32.totalorder %s29, 1
      %p281 = por %p279, %p280
      %p283 = scmp.ne.s32.totalorder %s268, %s282
      %p284 = scmp.eq.s32.totalorder %s29, 0
      %p285 = por %p283, %p284
      %s287 = sadd.s32 %s286, 1
      %p290 = scmp.eq.s32.totalorder %s23, 1
      %p291 = scmp.ne.s32.totalorder %s286, %s288
      %p292 = scmp.eq.s32.totalorder %s23, 0
      %p293 = por %p291, %p292
      %p294 = scmp.ne.s32.totalorder %s286, %s288
      %p295 = scmp.eq.s32.totalorder %s28, 1
      %p296 = por %p294, %p295
      %p297 = scmp.ne.s32.totalorder %s288, %s289
      %p298 = scmp.eq.s32.totalorder %s28, 0
      %p299 = por %p297, %p298
      %p300 = scmp.ne.s32.totalorder %s288, %s289
      %p301 = scmp.eq.s32.totalorder %s29, 1
      %p302 = por %p300, %p301
      %p304 = scmp.ne.s32.totalorder %s289, %s303
      %p305 = scmp.eq.s32.totalorder %s29, 0
      %p306 = por %p304, %p305
      %s308 = sadd.s32 %s307, 1
      %p311 = scmp.eq.s32.totalorder %s23, 1
      %p312 = scmp.ne.s32.totalorder %s307, %s309
      %p313 = scmp.eq.s32.totalorder %s23, 0
      %p314 = por %p312, %p313
      %p315 = scmp.ne.s32.totalorder %s307, %s309
      %p316 = scmp.eq.s32.totalorder %s28, 1
      %p317 = por %p315, %p316
      %p318 = scmp.ne.s32.totalorder %s309, %s310
      %p319 = scmp.eq.s32.totalorder %s28, 0
      %p320 = por %p318, %p319
      %p321 = scmp.ne.s32.totalorder %s309, %s310
      %p322 = scmp.eq.s32.totalorder %s29, 1
      %p323 = por %p321, %p322
      %p325 = scmp.ne.s32.totalorder %s310, %s324
      %p326 = scmp.eq.s32.totalorder %s29, 0
      %p327 = por %p325, %p326
      %s329 = sadd.s32 %s328, 1
      %p332 = scmp.eq.s32.totalorder %s23, 1
      %p333 = scmp.ne.s32.totalorder %s328, %s330
      %p334 = scmp.eq.s32.totalorder %s23, 0
      %p335 = por %p333, %p334
      %p336 = scmp.ne.s32.totalorder %s328, %s330
      %p337 = scmp.eq.s32.totalorder %s28, 1
      %p338 = por %p336, %p337
      %p339 = scmp.ne.s32.totalorder %s330, %s331
      %p340 = scmp.eq.s32.totalorder %s28, 0
      %p341 = por %p339, %p340
      %p342 = scmp.ne.s32.totalorder %s330, %s331
      %p343 = scmp.eq.s32.totalorder %s29, 1
      %p344 = por %p342, %p343
      %p346 = scmp.ne.s32.totalorder %s331, %s345
      %p347 = scmp.eq.s32.totalorder %s29, 0
      %p348 = por %p346, %p347
      %s349 = ssub.s32 %s30, %s42
      %s350 = ssub.s32 %s31, %s38
      %s351 = sor.u32 %s349, %s350
      %p352 = scmp.eq.s32.totalorder %s351, 0
      %s354 = sadd.s32 %s353, 1
      %s355 = scalar_select %p352, %s353, %s354
      %p358 = pneg %p352
      %p359 = scmp.eq.s32.totalorder %s23, 1
      %p360 = por %p358, %p359
      %p361 = scmp.ne.s32.totalorder %s353, %s356
      %p362 = scmp.eq.s32.totalorder %s23, 0
      %p363 = por %p361, %p362
      %p364 = scmp.ne.s32.totalorder %s353, %s356
      %p365 = scmp.eq.s32.totalorder %s28, 1
      %p366 = por %p364, %p365
      %p367 = scmp.ne.s32.totalorder %s356, %s357
      %p368 = scmp.eq.s32.totalorder %s28, 0
      %p369 = por %p367, %p368
      %p370 = scmp.ne.s32.totalorder %s356, %s357
      %p371 = scmp.eq.s32.totalorder %s29, 1
      %p372 = por %p370, %p371
      %p374 = scmp.ne.s32.totalorder %s357, %s373
      %p375 = scmp.eq.s32.totalorder %s29, 0
      %p376 = por %p374, %p375
      %p377 = scmp.le.s32.totalorder 1, %s23
      %p378 = scmp.lt.s32.totalorder %s23, 3
      %p379 = pnand %p377, %p378
      %p380 = pneg %p379
      // Predicated region
      $region9: #{tpu_custom_call.1} parent=5 // pred_check
        _
      $region10: #{tpu_custom_call.1} parent=5 // pred_check_branch
        %382 = sbr.rel (%p379) target = $region12
      $region11: #{tpu_custom_call.1} parent=5 // pred_region
        %s383 = ssub.s32 %s23, 1
        // Predicated region
        $region13: #{tpu_custom_call.1} parent=11 // pred_check
          %p384 = pneg %p110
        $region14: #{tpu_custom_call.1} parent=11 // pred_check_branch
          %386 = sbr.rel (%p384) target = $region16
        $region15: #{tpu_custom_call.1} parent=11 // pred_region
          _
        $region16: #{tpu_custom_call.1} parent=11 // pred_fallthru
          _
        // Predicated region
        $region17: #{tpu_custom_call.1} parent=11 // pred_check
          %p387 = pneg %p131
        $region18: #{tpu_custom_call.1} parent=11 // pred_check_branch
          %389 = sbr.rel (%p387) target = $region20
        $region19: #{tpu_custom_call.1} parent=11 // pred_region
          _
        $region20: #{tpu_custom_call.1} parent=11 // pred_fallthru
          _
        // Predicated region
        $region21: #{tpu_custom_call.1} parent=11 // pred_check
          %p390 = pneg %p152
        $region22: #{tpu_custom_call.1} parent=11 // pred_check_branch
          %392 = sbr.rel (%p390) target = $region24
        $region23: #{tpu_custom_call.1} parent=11 // pred_region
          _
        $region24: #{tpu_custom_call.1} parent=11 // pred_fallthru
          _
        // Predicated region
        $region25: #{tpu_custom_call.1} parent=11 // pred_check
          %p393 = pneg %p173
        $region26: #{tpu_custom_call.1} parent=11 // pred_check_branch
          %395 = sbr.rel (%p393) target = $region28
        $region27: #{tpu_custom_call.1} parent=11 // pred_region
          _
        $region28: #{tpu_custom_call.1} parent=11 // pred_fallthru
          _
        // Predicated region
        $region29: #{tpu_custom_call.1} parent=11 // pred_check
          %p396 = pneg %p194
        $region30: #{tpu_custom_call.1} parent=11 // pred_check_branch
          %398 = sbr.rel (%p396) target = $region32
        $region31: #{tpu_custom_call.1} parent=11 // pred_region
          _
        $region32: #{tpu_custom_call.1} parent=11 // pred_fallthru
          _
        // Predicated region
        $region33: #{tpu_custom_call.1} parent=11 // pred_check
          %p399 = pneg %p215
        $region34: #{tpu_custom_call.1} parent=11 // pred_check_branch
          %401 = sbr.rel (%p399) target = $region36
        $region35: #{tpu_custom_call.1} parent=11 // pred_region
          _
        $region36: #{tpu_custom_call.1} parent=11 // pred_fallthru
          _
        // Predicated region
        $region37: #{tpu_custom_call.1} parent=11 // pred_check
          %p402 = pneg %p236
        $region38: #{tpu_custom_call.1} parent=11 // pred_check_branch
          %404 = sbr.rel (%p402) target = $region40
        $region39: #{tpu_custom_call.1} parent=11 // pred_region
          _
        $region40: #{tpu_custom_call.1} parent=11 // pred_fallthru
          _
        // Predicated region
        $region41: #{tpu_custom_call.1} parent=11 // pred_check
          %p405 = pneg %p257
        $region42: #{tpu_custom_call.1} parent=11 // pred_check_branch
          %407 = sbr.rel (%p405) target = $region44
        $region43: #{tpu_custom_call.1} parent=11 // pred_region
          _
        $region44: #{tpu_custom_call.1} parent=11 // pred_fallthru
          _
        // Predicated region
        $region45: #{tpu_custom_call.1} parent=11 // pred_check
          %p408 = pneg %p278
        $region46: #{tpu_custom_call.1} parent=11 // pred_check_branch
          %410 = sbr.rel (%p408) target = $region48
        $region47: #{tpu_custom_call.1} parent=11 // pred_region
          _
        $region48: #{tpu_custom_call.1} parent=11 // pred_fallthru
          _
        // Predicated region
        $region49: #{tpu_custom_call.1} parent=11 // pred_check
          %p411 = pneg %p299
        $region50: #{tpu_custom_call.1} parent=11 // pred_check_branch
          %413 = sbr.rel (%p411) target = $region52
        $region51: #{tpu_custom_call.1} parent=11 // pred_region
          _
        $region52: #{tpu_custom_call.1} parent=11 // pred_fallthru
          _
        // Predicated region
        $region53: #{tpu_custom_call.1} parent=11 // pred_check
          %p414 = pneg %p320
        $region54: #{tpu_custom_call.1} parent=11 // pred_check_branch
          %416 = sbr.rel (%p414) target = $region56
        $region55: #{tpu_custom_call.1} parent=11 // pred_region
          _
        $region56: #{tpu_custom_call.1} parent=11 // pred_fallthru
          _
        // Predicated region
        $region57: #{tpu_custom_call.1} parent=11 // pred_check
          %p417 = pneg %p341
        $region58: #{tpu_custom_call.1} parent=11 // pred_check_branch
          %419 = sbr.rel (%p417) target = $region60
        $region59: #{tpu_custom_call.1} parent=11 // pred_region
          _
        $region60: #{tpu_custom_call.1} parent=11 // pred_fallthru
          _
      $region12: #{tpu_custom_call.1} parent=5 // pred_fallthru
        _
      %p420 = scmp.lt.s32.totalorder %s23, 2
      // Predicated region
      $region61: #{tpu_custom_call.1} parent=5 // pred_check
        %p421 = pneg %p420
      $region62: #{tpu_custom_call.1} parent=5 // pred_check_branch
        %423 = sbr.rel (%p421) target = $region64
      $region63: #{tpu_custom_call.1} parent=5 // pred_region
        // Predicated region
        $region65: #{tpu_custom_call.1} parent=63 // pred_check
          %p424 = pneg %p55
        $region66: #{tpu_custom_call.1} parent=63 // pred_check_branch
          %426 = sbr.rel (%p424) target = $region68
        $region67: #{tpu_custom_call.1} parent=63 // pred_region
          %p427 = scmp.lt.s32.totalorder %s30, 1
          %s428 = scalar_select %p427, %s30, 1
          %s429 = smul.addr %s428, 8
          %s430 = scalar_lea.vmem %s0, %s429
        $region68: #{tpu_custom_call.1} parent=63 // pred_fallthru
          _
        // Predicated region
        $region69: #{tpu_custom_call.1} parent=63 // pred_check
          %p431 = pneg %p83
        $region70: #{tpu_custom_call.1} parent=63 // pred_check_branch
          %433 = sbr.rel (%p431) target = $region72
        $region71: #{tpu_custom_call.1} parent=63 // pred_region
          %p434 = scmp.lt.s32.totalorder %s30, 1
          %s435 = scalar_select %p434, %s30, 1
          %p436 = scmp.lt.s32.totalorder %s31, 0
          %s437 = scalar_select %p436, %s31, 0
          %s438 = sadd.s32 %s437, %s435
          %s439 = smul.addr %s438, 8
          %s440 = scalar_lea.vmem %s1, %s439
        $region72: #{tpu_custom_call.1} parent=63 // pred_fallthru
          _
      $region64: #{tpu_custom_call.1} parent=5 // pred_fallthru
        _
      %p441 = scmp.le.s32.totalorder 1, %s23
      %p442 = scmp.lt.s32.totalorder %s23, 3
      %p443 = pnand %p441, %p442
      %p444 = pneg %p443
      // Predicated region
      $region73: #{tpu_custom_call.1} parent=5 // pred_check
        _
      $region74: #{tpu_custom_call.1} parent=5 // pred_check_branch
        %446 = sbr.rel (%p443) target = $region76
      $region75: #{tpu_custom_call.1} parent=5 // pred_region
        %s447 = ssub.s32 %s23, 1
        %p448 = scmp.lt.s32.totalorder %s32, 1
        %s449 = scalar_select %p448, %s32, 1
        %s450 = smul.addr %s449, 8
        %s451 = scalar_lea.vmem %s0, %s450
        %p452 = pneg %p61
        %p453 = pneg %p58
        %p454 = scmp.lt.s32.totalorder %s32, 1
        %s455 = scalar_select %p454, %s32, 1
        %p456 = scmp.lt.s32.totalorder %s33, 0
        %s457 = scalar_select %p456, %s33, 0
        %s458 = sadd.s32 %s457, %s455
        %s459 = smul.addr %s458, 8
        %s460 = scalar_lea.vmem %s1, %s459
        %p461 = pneg %p89
        %p462 = pneg %p86
        %p463 = pneg %p110
        %p464 = pneg %p107
        %p465 = pneg %p131
        %p466 = pneg %p128
        %p467 = pneg %p152
        %p468 = pneg %p149
        %p469 = pneg %p173
        %p470 = pneg %p170
        %p471 = pneg %p194
        %p472 = pneg %p191
        %p473 = pneg %p215
        %p474 = pneg %p212
        %p475 = pneg %p236
        %p476 = pneg %p233
        %p477 = pneg %p257
        %p478 = pneg %p254
        %p479 = pneg %p278
        %p480 = pneg %p275
        %p481 = pneg %p299
        %p482 = pneg %p296
        %p483 = pneg %p320
        %p484 = pneg %p317
        %p485 = pneg %p341
        %p486 = pneg %p338
        %p487 = pneg %p369
        %p488 = pneg %p366
        %s489 = sand.u32 %s356, 1
        %s490 = scalar_lea.sflag [#allocation5], %s489
        %s491 = sand.u32 %s356, 1
        %s492 = smul.addr %s491, 8
        %s493 = scalar_lea.vmem [#allocation4], %s492
        %p494 = scmp.lt.s32.totalorder %s32, 1
        %s495 = scalar_select %p494, %s32, 1
        %s496 = smul.addr %s495, 8
        %s497 = scalar_lea.vmem %s0, %s496
        %p498 = scmp.lt.s32.totalorder %s32, 1
        %s499 = scalar_select %p498, %s32, 1
        %p500 = scmp.lt.s32.totalorder %s33, 0
        %s501 = scalar_select %p500, %s33, 0
        %s502 = sadd.s32 %s501, %s499
        %s503 = smul.addr %s502, 8
        %s504 = scalar_lea.vmem %s1, %s503
        %s506 = smul.u32 %s33, 8
        %p507 = scmp.eq.s32.totalorder %s33, 0
        // Predicated region
        $region77: #{tpu_custom_call.1} parent=75 // pred_check
          %p508 = pneg %p507
        $region78: #{tpu_custom_call.1} parent=75 // pred_check_branch
          %510 = sbr.rel (%p508) target = $region80
        $region79: #{tpu_custom_call.1} parent=75 // pred_region
          %v511 = vld [vmem:[%s497] sm:$0xff]
          %v512 = vld [vmem:[%s2] sm:$0x1]
          %v513 = vld [vmem:[%s3] sm:$0x1]
          %vm514 = vcmask 261120
          %v515 = vsel %vm514, %v511, 0.0
          %516 = vadd.xlane.f32.xlu0 %v515
          %v517 = vpop.xlane.xlu0 %516
          %v518 = vrcp.pop 32.0
          %v519 = vmul.f32 32.0, %v518
          %v520 = vsub.f32 1.0, %v519
          %v521 = vmul.f32 %v518, %v520
          %v522 = vadd.f32 %v518, %v521
          %vm523 = vweird.f32 %v518
          %v524 = vsel %vm523, %v518, %v522
          %v525 = vmul.f32 %v517, %v524
          %v526 = vsub.f32 %v511, %v525
          %v527 = vmul.f32 %v526, %v526
          %v528 = vsel %vm514, %v527, 0.0
          %529 = vadd.xlane.f32.xlu0 %v528
          %v530 = vpop.xlane.xlu0 %529
          %v531 = vmul.f32 %v530, %v524
          %v532 = vadd.f32 %v531, 1e-05
          %v533 = vrsqrt.pop %v532
          %v534 = vmul.f32 %v533, %v532
          %v535 = vmul.f32 %v534, %v533
          %v536 = vmul.f32 0.5, %v535
          %v537 = vsub.f32 1.5, %v536
          %v538 = vmul.f32 %v533, %v537
          %vm539 = vweird.f32 %v532
          %vm540 = vweird.f32 %v533
          %vm541 = vmor %vm539, %vm540
          %v542 = vsel %vm541, %v533, %v538
          %v543 = vmul.f32 %v526, %v542
          %v545 = vperm.slane %v512, 0
          %v547 = vmul.f32 %v543, %v545
          %v549 = vperm.slane %v513, 0
          %v551 = vadd.f32 %v547, %v549
          %v552 = vpack.c.bf16 %v551, %v551
          %v553 = vld [vmem:[%s5] sm:$0xf]
          %v554 = vld [vmem:[%s5 + $0x4] sm:$0xf]
          %v555 = vld [vmem:[%s5 + $0x8] sm:$0xf]
          %v556 = vld [vmem:[%s5 + $0xc] sm:$0xf]
          %v561 = vunpack.c.l.b16 %v553
          %v562 = vunpack.c.l.b16 %v554
          %v563 = vunpack.c.l.b16 %v555
          %v564 = vunpack.c.l.b16 %v556
          %v565 = vpack.c.b16 %v562, %v561
          %v566 = vpack.c.b16 %v564, %v563
          %v570 = vsel %vm514, %v552, 0
          %572 = vmatpush.bf16.msra.mxu0 0
          %573 = vmatpush.bf16.msra.mxu0 0
          %574 = vmatpush.bf16.msra.mxu0 0
          %575 = vmatpush.bf16.msra.mxu0 0
          %576 = vmatpush.bf16.msra.mxu0 0
          %577 = vmatpush.bf16.msra.mxu0 0
          %578 = vmatpush.bf16.msra.mxu0 %v566
          %579 = vmatpush.bf16.msra.mxu0 %v565
          %580 = vmatmul.bf16.gmra.mxu0 %v570
          %v581 = vpop.f32.mrf.mxu0
          %v582 = vadd.f32 0.0, %v581
          %v583 = vpop.f32.mrf.mxu0
          %584 = vdwg.mxu0
          %v585 = vpack.c.bf16 %v582, %v582
          %vm586 = vcmask 257024
          %587 = vst.msk [vmem:[#allocation2] sm:$0xf] %vm586, %v585
          %589 = vrot.lane.b32.xlu0 %v585, 96
          %v590 = vpop.permute.xlu0 %589
          %592 = vst.msk [vmem:[#allocation3] sm:$0xf] %vm586, %v590
        $region80: #{tpu_custom_call.1} parent=75 // pred_fallthru
          _
        %s593 = scalar_lea.vmem %s497, %s506
        %v594 = vld [vmem:[%s593] sm:$0xff]
        %v595 = vld [vmem:[%s2] sm:$0x1]
        %v596 = vld [vmem:[%s3] sm:$0x1]
        %vm597 = vcmask 261120
        %v598 = vsel %vm597, %v594, 0.0
        %599 = vadd.xlane.f32.xlu0 %v598
        %v600 = vpop.xlane.xlu0 %599
        %v601 = vrcp.pop 32.0
        %v602 = vmul.f32 32.0, %v601
        %v603 = vsub.f32 1.0, %v602
        %v604 = vmul.f32 %v601, %v603
        %v605 = vadd.f32 %v601, %v604
        %vm606 = vweird.f32 %v601
        %v607 = vsel %vm606, %v601, %v605
        %v608 = vmul.f32 %v600, %v607
        %v609 = vsub.f32 %v594, %v608
        %v610 = vmul.f32 %v609, %v609
        %v611 = vsel %vm597, %v610, 0.0
        %612 = vadd.xlane.f32.xlu0 %v611
        %v613 = vpop.xlane.xlu0 %612
        %v614 = vmul.f32 %v613, %v607
        %v615 = vadd.f32 %v614, 1e-05
        %v616 = vrsqrt.pop %v615
        %v617 = vmul.f32 %v616, %v615
        %v618 = vmul.f32 %v617, %v616
        %v619 = vmul.f32 0.5, %v618
        %v620 = vsub.f32 1.5, %v619
        %v621 = vmul.f32 %v616, %v620
        %vm622 = vweird.f32 %v615
        %vm623 = vweird.f32 %v616
        %vm624 = vmor %vm622, %vm623
        %v625 = vsel %vm624, %v616, %v621
        %v626 = vmul.f32 %v609, %v625
        %v628 = vperm.slane %v595, 0
        %v630 = vmul.f32 %v626, %v628
        %v632 = vperm.slane %v596, 0
        %v634 = vadd.f32 %v630, %v632
        %v635 = vld [vmem:[%s504] sm:$0xff]
        %v636 = vpack.c.bf16 %v634, %v634
        %v637 = vld [vmem:[%s4] sm:$0xf]
        %v638 = vld [vmem:[%s4 + $0x4] sm:$0xf]
        %v639 = vld [vmem:[%s4 + $0x8] sm:$0xf]
        %v640 = vld [vmem:[%s4 + $0xc] sm:$0xf]
        %v645 = vunpack.c.l.b16 %v637
        %v646 = vunpack.c.l.b16 %v638
        %v647 = vunpack.c.l.b16 %v639
        %v648 = vunpack.c.l.b16 %v640
        %v649 = vpack.c.b16 %v646, %v645
        %v650 = vpack.c.b16 %v648, %v647
        %v654 = vsel %vm597, %v636, 0
        %656 = vmatpush.bf16.msra.mxu0 0
        %657 = vmatpush.bf16.msra.mxu0 0
        %658 = vmatpush.bf16.msra.mxu0 0
        %659 = vmatpush.bf16.msra.mxu0 0
        %660 = vmatpush.bf16.msra.mxu0 0
        %661 = vmatpush.bf16.msra.mxu0 0
        %662 = vmatpush.bf16.msra.mxu0 %v650
        %663 = vmatpush.bf16.msra.mxu0 %v649
        %664 = vmatmul.bf16.gmra.mxu0 %v654
        %v665 = vpop.f32.mrf.mxu0
        %v666 = vadd.f32 0.0, %v665
        %v667 = vpop.f32.mrf.mxu0
        %668 = vdwg.mxu0
        %v669 = vld [vmem:[#allocation2] sm:$0xf]
        %v670 = vld [vmem:[#allocation3] sm:$0xf]
        %v671 = vlaneseq
        %v672 = vshrl.u32 %v671, 7
        %v673 = vstv %s506
        %v674 = vadd.s32 %v672, %v673
        %v675 = vlaneseq
        %v676 = vand.u32 %v675, 127
        %vm677 = vcmp.le.s32.totalorder %v676, %v674
        %v678 = vpack.c.bf16 %v666, %v666
        %vm679 = vcmask 64512
        %v681 = vsel %vm679, %v678, 0
        %v684 = vsel %vm679, %v669, 0
        %686 = vmatpush.bf16.xpose.msra.mxu0 0
        %687 = vmatpush.bf16.xpose.msra.mxu0 0
        %688 = vmatpush.bf16.xpose.msra.mxu0 0
        %689 = vmatpush.bf16.xpose.msra.mxu0 0
        %690 = vmatpush.bf16.xpose.msra.mxu0 0
        %691 = vmatpush.bf16.xpose.msra.mxu0 0
        %692 = vmatpush.bf16.xpose.msra.mxu0 0
        %693 = vmatpush.bf16.xpose.msra.mxu0 %v684
        %694 = vmatmul.bf16.gmra.mxu0 %v681
        %v695 = vpop.f32.mrf.mxu0
        %v696 = vadd.f32 0.0, %v695
        %v697 = vpop.f32.mrf.mxu0
        %698 = vdwg.mxu0
        %700 = vset.pattern.permute.xlu0 0
        %701 = vperm.xlu0 %700, %v635
        %v702 = vpop.permute.xlu0 %701
        %v704 = vmul.f32 %v702, %v696
        %vm705 = vcmp.ne.f32.partialorder %v704, 0.0
        %vm706 = vmand %vm677, %vm705
        %v707 = vsel %vm706, %v704, -inf
        %v708 = vsel %vm679, %v707, -inf
        %709 = vmax.xlane.f32.xlu0 %v708
        %v710 = vpop.xlane.xlu0 %709
        %vm711 = vcmp.eq.f32.partialorder %v710, -inf
        %v712 = vsel %vm711, 0.0, %v710
        %v713 = vsub.f32 %v707, %v712
        %v714 = vmul.f32 %v713, 1.442695
        %v715 = vpow.pop %v714
        %v716 = vsel %vm679, %v715, 0.0
        %717 = vadd.xlane.f32.xlu0 %v716
        %v718 = vpop.xlane.xlu0 %717
        %vm719 = vcmp.eq.f32.partialorder %v718, 0.0
        %v720 = vrcp.pop %v718
        %v721 = vsel %vm719, 0.0, %v720
        %v722 = vmul.f32 %v715, %v721
        %v723 = vpack.c.bf16 %v722, %v722
        %v725 = vsel %vm679, %v723, 0
        %vm727 = vcmask 1043456
        %v729 = vsel %vm727, %v670, 0
        %731 = vmatpush.bf16.msra.mxu0 0
        %732 = vmatpush.bf16.msra.mxu0 0
        %733 = vmatpush.bf16.msra.mxu0 0
        %734 = vmatpush.bf16.msra.mxu0 0
        %735 = vmatpush.bf16.msra.mxu0 0
        %736 = vmatpush.bf16.msra.mxu0 0
        %737 = vmatpush.bf16.msra.mxu0 0
        %738 = vmatpush.bf16.msra.mxu0 %v729
        %739 = vmatmul.bf16.gmra.mxu0 %v725
        %v740 = vpop.f32.mrf.mxu0
        %v741 = vadd.f32 0.0, %v740
        %v742 = vpop.f32.mrf.mxu0
        %743 = vdwg.mxu0
        %v744 = vpack.c.bf16 %v741, %v741
        %v745 = vld [vmem:[%s6] sm:$0xf]
        %747 = vrot.lane.b32.xlu0 %v678, 120
        %v748 = vpop.permute.xlu0 %747
        %v750 = vunpack.c.l.b16 %v669
        %v751 = vpack.c.b16 %v750, %v750
        %752 = vrot.lane.b32.xlu0 %v751, 120
        %v753 = vpop.permute.xlu0 %752
        %v755 = vsel %vm679, %v748, 0
        %v758 = vsel %vm679, %v753, 0
        %760 = vmatpush.bf16.xpose.msra.mxu0 0
        %761 = vmatpush.bf16.xpose.msra.mxu0 0
        %762 = vmatpush.bf16.xpose.msra.mxu0 0
        %763 = vmatpush.bf16.xpose.msra.mxu0 0
        %764 = vmatpush.bf16.xpose.msra.mxu0 0
        %765 = vmatpush.bf16.xpose.msra.mxu0 0
        %766 = vmatpush.bf16.xpose.msra.mxu0 0
        %767 = vmatpush.bf16.xpose.msra.mxu0 %v758
        %768 = vmatmul.bf16.gmra.mxu0 %v755
        %v769 = vpop.f32.mrf.mxu0
        %v770 = vadd.f32 0.0, %v769
        %v771 = vpop.f32.mrf.mxu0
        %772 = vdwg.mxu0
        %v773 = vmul.f32 %v702, %v770
        %vm774 = vcmp.ne.f32.partialorder %v773, 0.0
        %vm775 = vmand %vm677, %vm774
        %v776 = vsel %vm775, %v773, -inf
        %v777 = vsel %vm679, %v776, -inf
        %778 = vmax.xlane.f32.xlu0 %v777
        %v779 = vpop.xlane.xlu0 %778
        %vm780 = vcmp.eq.f32.partialorder %v779, -inf
        %v781 = vsel %vm780, 0.0, %v779
        %v782 = vsub.f32 %v776, %v781
        %v783 = vmul.f32 %v782, 1.442695
        %v784 = vpow.pop %v783
        %v785 = vsel %vm679, %v784, 0.0
        %786 = vadd.xlane.f32.xlu0 %v785
        %v787 = vpop.xlane.xlu0 %786
        %vm788 = vcmp.eq.f32.partialorder %v787, 0.0
        %v789 = vrcp.pop %v787
        %v790 = vsel %vm788, 0.0, %v789
        %v791 = vmul.f32 %v784, %v790
        %v792 = vpack.c.bf16 %v791, %v791
        %v794 = vunpack.c.l.b16 %v670
        %v795 = vpack.c.b16 %v794, %v794
        %796 = vrot.lane.b32.xlu0 %v795, 120
        %v797 = vpop.permute.xlu0 %796
        %v799 = vsel %vm679, %v792, 0
        %v802 = vsel %vm727, %v797, 0
        %804 = vmatpush.bf16.msra.mxu0 0
        %805 = vmatpush.bf16.msra.mxu0 0
        %806 = vmatpush.bf16.msra.mxu0 0
        %807 = vmatpush.bf16.msra.mxu0 0
        %808 = vmatpush.bf16.msra.mxu0 0
        %809 = vmatpush.bf16.msra.mxu0 0
        %810 = vmatpush.bf16.msra.mxu0 0
        %811 = vmatpush.bf16.msra.mxu0 %v802
        %812 = vmatmul.bf16.gmra.mxu0 %v799
        %v813 = vpop.f32.mrf.mxu0
        %v814 = vadd.f32 0.0, %v813
        %v815 = vpop.f32.mrf.mxu0
        %816 = vdwg.mxu0
        %v817 = vpack.c.bf16 %v814, %v814
        %s818 = scalar_lea.vmem %s6, 4
        %v819 = vld [vmem:[%s818] sm:$0xf]
        %v821 = vsel %vm679, %v817, 0
        %v824 = vsel %vm727, %v819, 0
        %826 = vmatpush.bf16.msra.mxu0 0
        %827 = vmatpush.bf16.msra.mxu0 0
        %828 = vmatpush.bf16.msra.mxu0 0
        %829 = vmatpush.bf16.msra.mxu0 0
        %830 = vmatpush.bf16.msra.mxu0 0
        %831 = vmatpush.bf16.msra.mxu0 0
        %832 = vmatpush.bf16.msra.mxu0 0
        %833 = vmatpush.bf16.msra.mxu0 %v824
        %834 = vmatmul.bf16.gmra.mxu0 %v821
        %v835 = vpop.f32.mrf.mxu0
        %v836 = vadd.f32 0.0, %v835
        %v837 = vpop.f32.mrf.mxu0
        %838 = vdwg.mxu0
        %v840 = vsel %vm679, %v744, 0
        %v843 = vsel %vm727, %v745, 0
        %845 = vmatpush.bf16.msra.mxu0 0
        %846 = vmatpush.bf16.msra.mxu0 0
        %847 = vmatpush.bf16.msra.mxu0 0
        %848 = vmatpush.bf16.msra.mxu0 0
        %849 = vmatpush.bf16.msra.mxu0 0
        %850 = vmatpush.bf16.msra.mxu0 0
        %851 = vmatpush.bf16.msra.mxu0 0
        %852 = vmatpush.bf16.msra.mxu0 %v843
        %853 = vmatmul.bf16.gmra.mxu0 %v840
        %v854 = vpop.f32.mrf.mxu0
        %v855 = vadd.f32 %v836, %v854
        %v856 = vpop.f32.mrf.mxu0
        %857 = vdwg.mxu0
        %858 = vrot.lane.b32.xlu0 %v678, 112
        %v859 = vpop.permute.xlu0 %858
        %860 = vrot.lane.b32.xlu0 %v751, 112
        %v861 = vpop.permute.xlu0 %860
        %v863 = vsel %vm679, %v859, 0
        %v866 = vsel %vm679, %v861, 0
        %868 = vmatpush.bf16.xpose.msra.mxu0 0
        %869 = vmatpush.bf16.xpose.msra.mxu0 0
        %870 = vmatpush.bf16.xpose.msra.mxu0 0
        %871 = vmatpush.bf16.xpose.msra.mxu0 0
        %872 = vmatpush.bf16.xpose.msra.mxu0 0
        %873 = vmatpush.bf16.xpose.msra.mxu0 0
        %874 = vmatpush.bf16.xpose.msra.mxu0 0
        %875 = vmatpush.bf16.xpose.msra.mxu0 %v866
        %876 = vmatmul.bf16.gmra.mxu0 %v863
        %v877 = vpop.f32.mrf.mxu0
        %v878 = vadd.f32 0.0, %v877
        %v879 = vpop.f32.mrf.mxu0
        %880 = vdwg.mxu0
        %v881 = vmul.f32 %v702, %v878
        %vm882 = vcmp.ne.f32.partialorder %v881, 0.0
        %vm883 = vmand %vm677, %vm882
        %v884 = vsel %vm883, %v881, -inf
        %v885 = vsel %vm679, %v884, -inf
        %886 = vmax.xlane.f32.xlu0 %v885
        %v887 = vpop.xlane.xlu0 %886
        %vm888 = vcmp.eq.f32.partialorder %v887, -inf
        %v889 = vsel %vm888, 0.0, %v887
        %v890 = vsub.f32 %v884, %v889
        %v891 = vmul.f32 %v890, 1.442695
        %v892 = vpow.pop %v891
        %v893 = vsel %vm679, %v892, 0.0
        %894 = vadd.xlane.f32.xlu0 %v893
        %v895 = vpop.xlane.xlu0 %894
        %vm896 = vcmp.eq.f32.partialorder %v895, 0.0
        %v897 = vrcp.pop %v895
        %v898 = vsel %vm896, 0.0, %v897
        %v899 = vmul.f32 %v892, %v898
        %v900 = vpack.c.bf16 %v899, %v899
        %901 = vrot.lane.b32.xlu0 %v795, 112
        %v902 = vpop.permute.xlu0 %901
        %v904 = vsel %vm679, %v900, 0
        %v907 = vsel %vm727, %v902, 0
        %909 = vmatpush.bf16.msra.mxu0 0
        %910 = vmatpush.bf16.msra.mxu0 0
        %911 = vmatpush.bf16.msra.mxu0 0
        %912 = vmatpush.bf16.msra.mxu0 0
        %913 = vmatpush.bf16.msra.mxu0 0
        %914 = vmatpush.bf16.msra.mxu0 0
        %915 = vmatpush.bf16.msra.mxu0 0
        %916 = vmatpush.bf16.msra.mxu0 %v907
        %917 = vmatmul.bf16.gmra.mxu0 %v904
        %v918 = vpop.f32.mrf.mxu0
        %v919 = vadd.f32 0.0, %v918
        %v920 = vpop.f32.mrf.mxu0
        %921 = vdwg.mxu0
        %v922 = vpack.c.bf16 %v919, %v919
        %s923 = scalar_lea.vmem %s6, 8
        %v924 = vld [vmem:[%s923] sm:$0xf]
        %v926 = vsel %vm679, %v922, 0
        %v929 = vsel %vm727, %v924, 0
        %931 = vmatpush.bf16.msra.mxu0 0
        %932 = vmatpush.bf16.msra.mxu0 0
        %933 = vmatpush.bf16.msra.mxu0 0
        %934 = vmatpush.bf16.msra.mxu0 0
        %935 = vmatpush.bf16.msra.mxu0 0
        %936 = vmatpush.bf16.msra.mxu0 0
        %937 = vmatpush.bf16.msra.mxu0 0
        %938 = vmatpush.bf16.msra.mxu0 %v929
        %939 = vmatmul.bf16.gmra.mxu0 %v926
        %v940 = vpop.f32.mrf.mxu0
        %v941 = vadd.f32 0.0, %v940
        %v942 = vpop.f32.mrf.mxu0
        %943 = vdwg.mxu0
        %v944 = vadd.f32 %v855, %v941
        %945 = vrot.lane.b32.xlu0 %v678, 104
        %v946 = vpop.permute.xlu0 %945
        %947 = vrot.lane.b32.xlu0 %v751, 104
        %v948 = vpop.permute.xlu0 %947
        %v950 = vsel %vm679, %v946, 0
        %v953 = vsel %vm679, %v948, 0
        %955 = vmatpush.bf16.xpose.msra.mxu0 0
        %956 = vmatpush.bf16.xpose.msra.mxu0 0
        %957 = vmatpush.bf16.xpose.msra.mxu0 0
        %958 = vmatpush.bf16.xpose.msra.mxu0 0
        %959 = vmatpush.bf16.xpose.msra.mxu0 0
        %960 = vmatpush.bf16.xpose.msra.mxu0 0
        %961 = vmatpush.bf16.xpose.msra.mxu0 0
        %962 = vmatpush.bf16.xpose.msra.mxu0 %v953
        %963 = vmatmul.bf16.gmra.mxu0 %v950
        %v964 = vpop.f32.mrf.mxu0
        %v965 = vadd.f32 0.0, %v964
        %v966 = vpop.f32.mrf.mxu0
        %967 = vdwg.mxu0
        %v968 = vmul.f32 %v702, %v965
        %vm969 = vcmp.ne.f32.partialorder %v968, 0.0
        %vm970 = vmand %vm677, %vm969
        %v971 = vsel %vm970, %v968, -inf
        %v972 = vsel %vm679, %v971, -inf
        %973 = vmax.xlane.f32.xlu0 %v972
        %v974 = vpop.xlane.xlu0 %973
        %vm975 = vcmp.eq.f32.partialorder %v974, -inf
        %v976 = vsel %vm975, 0.0, %v974
        %v977 = vsub.f32 %v971, %v976
        %v978 = vmul.f32 %v977, 1.442695
        %v979 = vpow.pop %v978
        %v980 = vsel %vm679, %v979, 0.0
        %981 = vadd.xlane.f32.xlu0 %v980
        %v982 = vpop.xlane.xlu0 %981
        %vm983 = vcmp.eq.f32.partialorder %v982, 0.0
        %v984 = vrcp.pop %v982
        %v985 = vsel %vm983, 0.0, %v984
        %v986 = vmul.f32 %v979, %v985
        %v987 = vpack.c.bf16 %v986, %v986
        %988 = vrot.lane.b32.xlu0 %v795, 104
        %v989 = vpop.permute.xlu0 %988
        %v991 = vsel %vm679, %v987, 0
        %v994 = vsel %vm727, %v989, 0
        %996 = vmatpush.bf16.msra.mxu0 0
        %997 = vmatpush.bf16.msra.mxu0 0
        %998 = vmatpush.bf16.msra.mxu0 0
        %999 = vmatpush.bf16.msra.mxu0 0
        %1000 = vmatpush.bf16.msra.mxu0 0
        %1001 = vmatpush.bf16.msra.mxu0 0
        %1002 = vmatpush.bf16.msra.mxu0 0
        %1003 = vmatpush.bf16.msra.mxu0 %v994
        %1004 = vmatmul.bf16.gmra.mxu0 %v991
        %v1005 = vpop.f32.mrf.mxu0
        %v1006 = vadd.f32 0.0, %v1005
        %v1007 = vpop.f32.mrf.mxu0
        %1008 = vdwg.mxu0
        %v1009 = vpack.c.bf16 %v1006, %v1006
        %s1010 = scalar_lea.vmem %s6, 12
        %v1011 = vld [vmem:[%s1010] sm:$0xf]
        %v1013 = vsel %vm679, %v1009, 0
        %v1016 = vsel %vm727, %v1011, 0
        %1018 = vmatpush.bf16.msra.mxu0 0
        %1019 = vmatpush.bf16.msra.mxu0 0
        %1020 = vmatpush.bf16.msra.mxu0 0
        %1021 = vmatpush.bf16.msra.mxu0 0
        %1022 = vmatpush.bf16.msra.mxu0 0
        %1023 = vmatpush.bf16.msra.mxu0 0
        %1024 = vmatpush.bf16.msra.mxu0 0
        %1025 = vmatpush.bf16.msra.mxu0 %v1016
        %1026 = vmatmul.bf16.gmra.mxu0 %v1013
        %v1027 = vpop.f32.mrf.mxu0
        %v1028 = vadd.f32 0.0, %v1027
        %v1029 = vpop.f32.mrf.mxu0
        %1030 = vdwg.mxu0
        %v1031 = vadd.f32 %v944, %v1028
        %v1032 = vadd.f32 %v594, %v1031
        %v1033 = vld [vmem:[%s7] sm:$0x1]
        %v1035 = vperm.slane %v1033, 0
        %v1037 = vadd.f32 %v1032, %v1035
        %v1038 = vld [vmem:[%s8] sm:$0x1]
        %v1039 = vld [vmem:[%s9] sm:$0x1]
        %v1040 = vsel %vm597, %v1037, 0.0
        %1041 = vadd.xlane.f32.xlu0 %v1040
        %v1042 = vpop.xlane.xlu0 %1041
        %v1043 = vmul.f32 %v1042, %v607
        %v1044 = vsub.f32 %v1037, %v1043
        %v1045 = vmul.f32 %v1044, %v1044
        %v1046 = vsel %vm597, %v1045, 0.0
        %1047 = vadd.xlane.f32.xlu0 %v1046
        %v1048 = vpop.xlane.xlu0 %1047
        %v1049 = vmul.f32 %v1048, %v607
        %v1050 = vadd.f32 %v1049, 1e-05
        %v1051 = vrsqrt.pop %v1050
        %v1052 = vmul.f32 %v1051, %v1050
        %v1053 = vmul.f32 %v1052, %v1051
        %v1054 = vmul.f32 0.5, %v1053
        %v1055 = vsub.f32 1.5, %v1054
        %v1056 = vmul.f32 %v1051, %v1055
        %vm1057 = vweird.f32 %v1050
        %vm1058 = vweird.f32 %v1051
        %vm1059 = vmor %vm1057, %vm1058
        %v1060 = vsel %vm1059, %v1051, %v1056
        %v1061 = vmul.f32 %v1044, %v1060
        %v1063 = vperm.slane %v1038, 0
        %v1065 = vmul.f32 %v1061, %v1063
        %v1067 = vperm.slane %v1039, 0
        %v1069 = vadd.f32 %v1065, %v1067
        %v1070 = vpack.c.bf16 %v1069, %v1069
        %v1071 = vld [vmem:[%s10] sm:$0xf]
        %v1072 = vld [vmem:[%s10 + $0x4] sm:$0xf]
        %v1073 = vld [vmem:[%s10 + $0x8] sm:$0xf]
        %v1074 = vld [vmem:[%s10 + $0xc] sm:$0xf]
        %v1075 = vld [vmem:[%s11] sm:$0x1]
        %v1077 = vperm.slane %v1075, 0
        %v1083 = vunpack.c.l.b16 %v1071
        %v1084 = vunpack.c.l.b16 %v1072
        %v1085 = vunpack.c.l.b16 %v1073
        %v1086 = vunpack.c.l.b16 %v1074
        %v1087 = vpack.c.b16 %v1084, %v1083
        %v1088 = vpack.c.b16 %v1086, %v1085
        %v1092 = vsel %vm597, %v1070, 0
        %1094 = vmatpush.bf16.msra.mxu0 0
        %1095 = vmatpush.bf16.msra.mxu0 0
        %1096 = vmatpush.bf16.msra.mxu0 0
        %1097 = vmatpush.bf16.msra.mxu0 0
        %1098 = vmatpush.bf16.msra.mxu0 0
        %1099 = vmatpush.bf16.msra.mxu0 0
        %1100 = vmatpush.bf16.msra.mxu0 %v1088
        %1101 = vmatpush.bf16.msra.mxu0 %v1087
        %1102 = vmatmul.bf16.gmra.mxu0 %v1092
        %v1103 = vpop.f32.mrf.mxu0
        %v1104 = vadd.f32 %v1077, %v1103
        %v1105 = vpop.f32.mrf.mxu0
        %1106 = vdwg.mxu0
        %v1107 = vmax.f32 %v1104, 0.0
        %v1108 = vpack.c.bf16 %v1107, %v1107
        %v1109 = vld [vmem:[%s12] sm:$0xf]
        %v1110 = vld [vmem:[%s12 + $0x4] sm:$0xf]
        %v1111 = vld [vmem:[%s12 + $0x8] sm:$0xf]
        %v1112 = vld [vmem:[%s12 + $0xc] sm:$0xf]
        %v1113 = vld [vmem:[%s12 + $0x10] sm:$0xf]
        %v1114 = vld [vmem:[%s12 + $0x14] sm:$0xf]
        %v1115 = vld [vmem:[%s12 + $0x18] sm:$0xf]
        %v1116 = vld [vmem:[%s12 + $0x1c] sm:$0xf]
        %v1117 = vld [vmem:[%s12 + $0x20] sm:$0xf]
        %v1118 = vld [vmem:[%s12 + $0x24] sm:$0xf]
        %v1119 = vld [vmem:[%s12 + $0x28] sm:$0xf]
        %v1120 = vld [vmem:[%s12 + $0x2c] sm:$0xf]
        %v1121 = vld [vmem:[%s12 + $0x30] sm:$0xf]
        %v1122 = vld [vmem:[%s12 + $0x34] sm:$0xf]
        %v1123 = vld [vmem:[%s12 + $0x38] sm:$0xf]
        %v1124 = vld [vmem:[%s12 + $0x3c] sm:$0xf]
        %v1125 = vld [vmem:[%s13] sm:$0x1]
        %v1127 = vperm.slane %v1125, 0
        %v1145 = vunpack.c.l.b16 %v1109
        %v1146 = vunpack.c.l.b16 %v1110
        %v1147 = vunpack.c.l.b16 %v1111
        %v1148 = vunpack.c.l.b16 %v1112
        %v1149 = vunpack.c.l.b16 %v1113
        %v1150 = vunpack.c.l.b16 %v1114
        %v1151 = vunpack.c.l.b16 %v1115
        %v1152 = vunpack.c.l.b16 %v1116
        %v1153 = vunpack.c.l.b16 %v1117
        %v1154 = vunpack.c.l.b16 %v1118
        %v1155 = vunpack.c.l.b16 %v1119
        %v1156 = vunpack.c.l.b16 %v1120
        %v1157 = vunpack.c.l.b16 %v1121
        %v1158 = vunpack.c.l.b16 %v1122
        %v1159 = vunpack.c.l.b16 %v1123
        %v1160 = vunpack.c.l.b16 %v1124
        %v1161 = vpack.c.b16 %v1146, %v1145
        %v1162 = vpack.c.b16 %v1148, %v1147
        %v1163 = vpack.c.b16 %v1150, %v1149
        %v1164 = vpack.c.b16 %v1152, %v1151
        %v1165 = vpack.c.b16 %v1154, %v1153
        %v1166 = vpack.c.b16 %v1156, %v1155
        %v1167 = vpack.c.b16 %v1158, %v1157
        %v1168 = vpack.c.b16 %v1160, %v1159
        %1177 = vmatpush.bf16.msra.mxu0 %v1168
        %1178 = vmatpush.bf16.msra.mxu0 %v1167
        %1179 = vmatpush.bf16.msra.mxu0 %v1166
        %1180 = vmatpush.bf16.msra.mxu0 %v1165
        %1181 = vmatpush.bf16.msra.mxu0 %v1164
        %1182 = vmatpush.bf16.msra.mxu0 %v1163
        %1183 = vmatpush.bf16.msra.mxu0 %v1162
        %1184 = vmatpush.bf16.msra.mxu0 %v1161
        %1185 = vmatmul.bf16.gmra.mxu0 %v1108
        %v1186 = vpop.f32.mrf.mxu0
        %v1187 = vadd.f32 %v1127, %v1186
        %v1188 = vpop.f32.mrf.mxu0
        %1189 = vdwg.mxu0
        %v1190 = vadd.f32 %v1037, %v1187
        %1191 = vst.msk [vmem:[%s493] sm:$0xff] %vm597, %v1190
        %s1192 = sand.u32 %s356, 1
        %s1193 = scalar_lea.sflag [#allocation5], %s1192
        %s1194 = sand.u32 %s356, 1
        %s1195 = smul.addr %s1194, 8
        %s1196 = scalar_lea.vmem [#allocation4], %s1195
        // Predicated region
        $region81: #{tpu_custom_call.1} parent=75 // pred_check
          %p1197 = pneg %p366
        $region82: #{tpu_custom_call.1} parent=75 // pred_check_branch
          %1199 = sbr.rel (%p1197) target = $region84
        $region83: #{tpu_custom_call.1} parent=75 // pred_region
          %1201 = vsyncadd %s1193, 0
          %s1202 = sadd.s32 %s33, %s32
          %s1203 = smul.addr %s1202, 8
          %s1204 = scalar_lea.hbm %s14, %s1203
          %s1206 = sshll.u32 %s1196, 4
          %s1207 = int_to_ptr.vmem [resolvable:$true] %s1206
          %s1208 = sshll.u32 %s1204, 4
          %s1209 = int_to_ptr.hbm [resolvable:$true] %s1208
          %1211 = dma.vmem_to_hbm [thread:$0]  %s1207, 128, %s1209, %s1193
        $region84: #{tpu_custom_call.1} parent=75 // pred_fallthru
          _
      $region76: #{tpu_custom_call.1} parent=5 // pred_fallthru
        _
      %p1212 = scmp.le.s32.totalorder 2, %s23
      // Predicated region
      $region85: #{tpu_custom_call.1} parent=5 // pred_check
        %p1213 = pneg %p1212
      $region86: #{tpu_custom_call.1} parent=5 // pred_check_branch
        %1215 = sbr.rel (%p1213) target = $region88
      $region87: #{tpu_custom_call.1} parent=5 // pred_region
        %s1216 = ssub.s32 %s23, 2
        // Predicated region
        $region89: #{tpu_custom_call.1} parent=87 // pred_check
          %p1217 = pneg %p372
        $region90: #{tpu_custom_call.1} parent=87 // pred_check_branch
          %1219 = sbr.rel (%p1217) target = $region92
        $region91: #{tpu_custom_call.1} parent=87 // pred_region
          %s1220 = sand.u32 %s357, 1
          %s1221 = scalar_lea.sflag [#allocation5], %s1220
          %s1222 = sand.u32 %s357, 1
          %s1223 = smul.addr %s1222, 8
          %s1224 = scalar_lea.vmem [#allocation4], %s1223
          %1226 = dma.done %s1221, 128
        $region92: #{tpu_custom_call.1} parent=87 // pred_fallthru
          _
      $region88: #{tpu_custom_call.1} parent=5 // pred_fallthru
        _
    $region6: #{tpu_custom_call.1} parent=1 // loop_footer
      %s27 = sadd.s32 1, %s23
    $region7: #{tpu_custom_call.1} parent=1 // loop_footer_branch
      %22 = sbr.rel target = $region3
    $region8: #{tpu_custom_call.1} parent=1 // loop_exit
      _
    %1227 = vsyncpa [#allocation5], 1
    %s1228 = scalar_lea.sflag [#allocation5], 1
    %1229 = vsyncpa %s1228, 1

</llo_original>
